<compile_context>
chip_gen: v5e
topology: v5e:2x2
jax: 0.10.0
libtpu: 0.0.40
codegen_flags: <defaults>
</compile_context>

<pallas_src>
import functools
import math

import jax
import jax.numpy as jnp
from jax.experimental import pallas as pl
from jax.experimental.pallas import tpu as pltpu


def _round_up(x, m):
    return (x + m - 1) // m * m


# ----------------------------------------------------------------------------
# Pallas kernel factory: fused multi-layer LSTM recurrence over one time chunk.
# Gate order (PyTorch): i, f, g, o packed contiguously in G4 lanes.
#
# Per-chunk block shapes (Bp = padded batch, H = hidden, G4 = rnd(4H, 128)):
#   gx0_ref       : (TC*Bp, G4)   layer-0 gate inputs for this chunk (cdt)
#   w_hh_ref      : (L, H, G4)    recurrent weights (cdt), resident
#   w_ih_rest_ref : (max(L-1,1), H, G4)  input weights for layers >= 1 (cdt)
#   b_rest_ref    : (max(L-1,1), 1, G4)  combined biases for layers >= 1 (f32)
#   h0_ref,c0_ref : (L, Bp, H)    initial state (f32), resident
#   out_ref       : (TC*Bp, H)    last layer's h for this chunk (f32)
#   hT_ref,cT_ref : (L, Bp, H)    final state (f32), resident
#   h_sc, c_sc    : (L, Bp, H)    state carried across chunks (scratch)
#   seq_sc        : (TC*Bp, H)    current layer's chunk outputs (L > 1 only)
#   gx_sc         : (TC*Bp, G4)   next layer's gate inputs (L > 1 only)
# ----------------------------------------------------------------------------
def _make_lstm_kernel(L, H, G4, T, TC, Bp, unroll):
    needs_mask = (T % TC) != 0  # padded timesteps exist in the last chunk

    def kernel(gx0_ref, w_hh_ref, w_ih_rest_ref, b_rest_ref, h0_ref, c0_ref,
               out_ref, hT_ref, cT_ref,
               h_sc, c_sc, *extra):
        chunk = pl.program_id(0)

        # Load the initial state into the carried scratch on the first chunk.
        @pl.when(chunk == 0)
        def _():
            h_sc[...] = h0_ref[...]
            c_sc[...] = c0_ref[...]

        if L > 1:
            seq_sc, gx_sc = extra

        for layer in range(L):                        # static unroll over layers
            if layer == 0:
                gx = gx0_ref
            else:
                # Hoisted input projection for this layer: one per-chunk
                # (TC*Bp, H) x (H, G4) matmul, entirely in VMEM.
                proj = jnp.dot(seq_sc[...].astype(w_ih_rest_ref.dtype),
                               w_ih_rest_ref[layer - 1],
                               preferred_element_type=jnp.float32)
                gx_sc[...] = (proj + b_rest_ref[layer - 1]).astype(gx_sc.dtype)
                gx = gx_sc

            w_hh = w_hh_ref[layer]                    # (H, G4), loop invariant
            tgt = out_ref if layer == L - 1 else seq_sc

            def step(t, carry, gx=gx, w_hh=w_hh, tgt=tgt):
                h, c = carry
                row = pl.multiple_of(t * Bp, Bp)
                # Only the hidden-to-hidden matmul is on the serial path:
                # one (Bp, H) x (H, G4) MXU call per step.
                gates = (gx[pl.ds(row, Bp), :].astype(jnp.float32)
                         + jnp.dot(h.astype(w_hh.dtype), w_hh,
                                   preferred_element_type=jnp.float32))
                i_g = jax.nn.sigmoid(gates[:, 0 * H:1 * H])
                f_g = jax.nn.sigmoid(gates[:, 1 * H:2 * H])
                g_g = jnp.tanh(gates[:, 2 * H:3 * H])
                o_g = jax.nn.sigmoid(gates[:, 3 * H:4 * H])
                c_new = f_g * c + i_g * g_g
                h_new = o_g * jnp.tanh(c_new)
                if needs_mask:
                    valid = (chunk * TC + t) < T
                    h_new = jnp.where(valid, h_new, h)
                    c_new = jnp.where(valid, c_new, c)
                tgt[pl.ds(row, Bp), :] = h_new
                return h_new, c_new

            h_fin, c_fin = jax.lax.fori_loop(
                0, TC, step, (h_sc[layer], c_sc[layer]), unroll=unroll)
            h_sc[layer] = h_fin
            c_sc[layer] = c_fin

        # Final state written once; hT/cT blocks are resident across the grid.
        @pl.when(chunk == pl.num_programs(0) - 1)
        def _():
            hT_ref[...] = h_sc[...]
            cT_ref[...] = c_sc[...]

    return kernel


# ----------------------------------------------------------------------------
# Parameter construction (mirrors PyTorch shapes / init ranges).
# ----------------------------------------------------------------------------
def init_params(key, num_layers, embed_size, hidden_size, vocab_size):
    params = {"layers": []}
    key, k_emb = jax.random.split(key)
    # nn.Embedding default init: N(0, 1)
    params["embed"] = jax.random.normal(k_emb, (vocab_size, embed_size),
                                        jnp.float32)
    bound = 1.0 / float(hidden_size) ** 0.5
    for layer in range(num_layers):
        d_in = 2 * embed_size if layer == 0 else hidden_size
        key, k1, k2, k3, k4 = jax.random.split(key, 5)
        w_ih = jax.random.uniform(k1, (4 * hidden_size, d_in), jnp.float32,
                                  -bound, bound)
        w_hh = jax.random.uniform(k2, (4 * hidden_size, hidden_size),
                                  jnp.float32, -bound, bound)
        b_ih = jax.random.uniform(k3, (4 * hidden_size,), jnp.float32,
                                  -bound, bound)
        b_hh = jax.random.uniform(k4, (4 * hidden_size,), jnp.float32,
                                  -bound, bound)
        params["layers"].append({
            "w_ih_t": w_ih.T,            # (D_in, 4H)
            "w_hh_t": w_hh.T,            # (H, 4H)
            "b": b_ih + b_hh,            # (4H,)
        })
    return params


# ----------------------------------------------------------------------------
# Forward pass matching Dec_LSTM_CNN_Arch.forward (eval semantics).
# ----------------------------------------------------------------------------
def dec_lstm_cnn_forward(params, dec_w2v_embed, dec_ind_embed,
                         dec_h_out=None, dec_c_out=None,
                         compute_dtype=jnp.bfloat16, time_chunk=None):
    # Glue: embedding gather + concat (plain JAX).
    ind_embed = jnp.take(params["embed"], dec_ind_embed, axis=0)       # (B,T,E)
    lstm_inp = jnp.concatenate([dec_w2v_embed, ind_embed],
                               axis=2).astype(jnp.float32)             # (B,T,2E)
    B, T, Din = lstm_inp.shape
    layers = params["layers"]
    L = len(layers)
    H = layers[0]["w_hh_t"].shape[0]
    G4 = _round_up(4 * H, 128)           # packed gate width: [i|f|g|o] + pad
    Bp = _round_up(max(B, 1), 8)
    cdt = jnp.dtype(compute_dtype)
    cbytes = cdt.itemsize
    Hl = _round_up(H, 128)               # lane-padded width (VMEM accounting)

    if dec_h_out is None:
        dec_h_out = jnp.zeros((L, B, H), jnp.float32)
    if dec_c_out is None:
        dec_c_out = jnp.zeros((L, B, H), jnp.float32)

    # --- time chunk: bound VMEM independent of T and enable pipelined I/O ---
    if time_chunk is None:
        per_step_bytes = Bp * (2 * G4 * cbytes + 2 * Hl * 4)
        time_chunk = max(1, (2 << 20) // max(per_step_bytes, 1))
    min_rows = max(8, 32 // cbytes)                  # sublane tile per dtype
    align = min_rows // math.gcd(Bp, min_rows)       # chunk alignment in steps
    TC = max(1, min(int(time_chunk), T))
    TC = _round_up(TC, align)
    n_chunks = pl.cdiv(T, TC)
    Tpad = n_chunks * TC
    unroll = TC if TC <= 8 else 4                    # bounded unroll

    # Time-major, batch- and time-padded input.
    x_tm = jnp.transpose(lstm_inp, (1, 0, 2))                          # (T,B,2E)
    x_tm = jnp.pad(x_tm, ((0, Tpad - T), (0, Bp - B), (0, 0)))         # (Tpad,Bp,2E)
    x_flat = x_tm.reshape(Tpad * Bp, Din)

    # Layer-0 input projection hoisted out of the recurrence (one big matmul).
    w_ih0 = jnp.pad(layers[0]["w_ih_t"], ((0, 0), (0, G4 - 4 * H))).astype(cdt)
    b0 = jnp.pad(layers[0]["b"], (0, G4 - 4 * H))
    gx0 = (jnp.dot(x_flat.astype(cdt), w_ih0,
                   preferred_element_type=jnp.float32) + b0).astype(cdt)

    # Stacked packed-gate weights (no per-gate padding).
    w_hh_all = jnp.stack([
        jnp.pad(lp["w_hh_t"], ((0, 0), (0, G4 - 4 * H))) for lp in layers
    ]).astype(cdt)                                                      # (L,H,G4)
    if L > 1:
        w_ih_rest = jnp.stack([
            jnp.pad(lp["w_ih_t"], ((0, 0), (0, G4 - 4 * H)))
            for lp in layers[1:]]).astype(cdt)                          # (L-1,H,G4)
        b_rest = jnp.stack([
            jnp.pad(lp["b"], (0, G4 - 4 * H))[None, :]
            for lp in layers[1:]]).astype(jnp.float32)                  # (L-1,1,G4)
    else:
        w_ih_rest = jnp.zeros((1, H, G4), cdt)
        b_rest = jnp.zeros((1, 1, G4), jnp.float32)

    h0 = jnp.pad(dec_h_out.astype(jnp.float32), ((0, 0), (0, Bp - B), (0, 0)))
    c0 = jnp.pad(dec_c_out.astype(jnp.float32), ((0, 0), (0, Bp - B), (0, 0)))

    # --- scratch: carried state + (only if L > 1) per-chunk gate buffers ----
    scratch = [pltpu.VMEM((L, Bp, H), jnp.float32),      # h carried over chunks
               pltpu.VMEM((L, Bp, H), jnp.float32)]      # c carried over chunks
    if L > 1:
        scratch += [pltpu.VMEM((TC * Bp, H), jnp.float32),   # current-layer seq
                    pltpu.VMEM((TC * Bp, G4), cdt)]          # next-layer gates

    # --- explicit scoped-VMEM limit sized from the actual resident set -----
    Hr = _round_up(H, 8)
    est = 0
    est += 2 * TC * Bp * G4 * cbytes                         # gx0 (2 buffers)
    est += 2 * TC * Bp * Hl * 4                              # out (2 buffers)
    est += 2 * L * Hr * G4 * cbytes                          # w_hh_all
    est += 2 * max(L - 1, 1) * Hr * G4 * cbytes              # w_ih_rest
    est += 2 * max(L - 1, 1) * 8 * G4 * 4                    # b_rest
    est += 4 * 2 * L * Bp * Hl * 4                           # h0,c0,hT,cT
    est += 2 * L * Bp * Hl * 4                               # h_sc, c_sc
    if L > 1:
        est += TC * Bp * Hl * 4 + TC * Bp * G4 * cbytes      # seq_sc, gx_sc
    vmem_limit = int(min(max(2 * est + (4 << 20), 16 << 20), 56 << 20))

    kernel = _make_lstm_kernel(L, H, G4, T, TC, Bp, unroll)

    grid_spec = pltpu.PrefetchScalarGridSpec(
        num_scalar_prefetch=0,
        grid=(n_chunks,),
        in_specs=[
            pl.BlockSpec((TC * Bp, G4), lambda c: (c, 0)),       # gx0, streamed
            pl.BlockSpec(w_hh_all.shape, lambda c: (0, 0, 0)),   # resident
            pl.BlockSpec(w_ih_rest.shape, lambda c: (0, 0, 0)),  # resident
            pl.BlockSpec(b_rest.shape, lambda c: (0, 0, 0)),     # resident
            pl.BlockSpec((L, Bp, H), lambda c: (0, 0, 0)),       # h0
            pl.BlockSpec((L, Bp, H), lambda c: (0, 0, 0)),       # c0
        ],
        out_specs=[
            pl.BlockSpec((TC * Bp, H), lambda c: (c, 0)),        # out, streamed
            pl.BlockSpec((L, Bp, H), lambda c: (0, 0, 0)),       # hT
            pl.BlockSpec((L, Bp, H), lambda c: (0, 0, 0)),       # cT
        ],
        scratch_shapes=scratch,
    )

    out_flat, hT_p, cT_p = pl.pallas_call(
        kernel,
        out_shape=(jax.ShapeDtypeStruct((Tpad * Bp, H), jnp.float32),
                   jax.ShapeDtypeStruct((L, Bp, H), jnp.float32),
                   jax.ShapeDtypeStruct((L, Bp, H), jnp.float32)),
        grid_spec=grid_spec,
        compiler_params=pltpu.CompilerParams(
            dimension_semantics=("arbitrary",),      # chunks carry h/c -> serial
            vmem_limit_bytes=vmem_limit),
    )(gx0, w_hh_all, w_ih_rest, b_rest, h0, c0)

    out = jnp.transpose(out_flat.reshape(Tpad, Bp, H)[:T, :B, :], (1, 0, 2))
    # TODO(synk): nn.LSTM inter-layer dropout(p=0.3) only applies in training
    # mode; eval semantics (no dropout) implemented here.
    return out, (hT_p[:, :B, :], cT_p[:, :B, :])


# ----------------------------------------------------------------------------
# Pure-JAX reference LSTM (for correctness check).
# ----------------------------------------------------------------------------
def _ref_forward(params, dec_w2v_embed, dec_ind_embed):
    ind_embed = jnp.take(params["embed"], dec_ind_embed, axis=0)
    x = jnp.concatenate([dec_w2v_embed, ind_embed], axis=2)
    x = jnp.transpose(x, (1, 0, 2))
    B = x.shape[1]
    H = params["layers"][0]["w_hh_t"].shape[0]
    h_fin, c_fin = [], []
    for lp in params["layers"]:
        def step(carry, x_t):
            h, c = carry
            g = x_t @ lp["w_ih_t"] + h @ lp["w_hh_t"] + lp["b"]
            i = jax.nn.sigmoid(g[:, 0*H:1*H]); f = jax.nn.sigmoid(g[:, 1*H:2*H])
            gg = jnp.tanh(g[:, 2*H:3*H]); o = jax.nn.sigmoid(g[:, 3*H:4*H])
            c = f * c + i * gg
            h = o * jnp.tanh(c)
            return (h, c), h
        (h, c), ys = jax.lax.scan(step,
                                  (jnp.zeros((B, H)), jnp.zeros((B, H))), x)
        x = ys
        h_fin.append(h); c_fin.append(c)
    return (jnp.transpose(x, (1, 0, 2)),
            (jnp.stack(h_fin, 0), jnp.stack(c_fin, 0)))


if __name__ == "__main__":
    # Small, module-consistent shapes.
    num_dec_lstm_layers = 2
    embed_size = 32
    dec_hidden_size = 32
    vocab_size = 50
    B, T = 2, 8

    key = jax.random.PRNGKey(0)
    key, k_params, k_w2v, k_ind = jax.random.split(key, 4)

    params = init_params(k_params, num_dec_lstm_layers, embed_size,
                         dec_hidden_size, vocab_size)
    dec_w2v_embed = jax.random.normal(k_w2v, (B, T, embed_size), jnp.float32)
    dec_ind_embed = jax.random.randint(k_ind, (B, T), 0, vocab_size,
                                       dtype=jnp.int32)

    ref_out, (ref_h, ref_c) = _ref_forward(params, dec_w2v_embed,
                                           dec_ind_embed)

    # 1) Exact f32 path: tight check against the pure-JAX reference.
    fwd_f32 = jax.jit(functools.partial(dec_lstm_cnn_forward,
                                        compute_dtype=jnp.float32))
    out, (h_out, c_out) = fwd_f32(params, dec_w2v_embed, dec_ind_embed)
    jax.block_until_ready((out, h_out, c_out))
    assert out.shape == (B, T, dec_hidden_size)
    assert h_out.shape == (num_dec_lstm_layers, B, dec_hidden_size)
    assert c_out.shape == (num_dec_lstm_layers, B, dec_hidden_size)
    assert jnp.allclose(out, ref_out, atol=1e-4, rtol=1e-4)
    assert jnp.allclose(h_out, ref_h, atol=1e-4, rtol=1e-4)
    assert jnp.allclose(c_out, ref_c, atol=1e-4, rtol=1e-4)

    # 2) bf16 weights / gate-input path (v6e/v7x fast path): looser tolerance.
    fwd_bf16 = jax.jit(functools.partial(dec_lstm_cnn_forward,
                                         compute_dtype=jnp.bfloat16))
    out_b, (h_b, c_b) = fwd_bf16(params, dec_w2v_embed, dec_ind_embed)
    jax.block_until_ready((out_b, h_b, c_b))
    assert jnp.allclose(out_b, ref_out, atol=5e-2, rtol=5e-2)
    assert jnp.allclose(h_b, ref_h, atol=5e-2, rtol=5e-2)
    assert jnp.allclose(c_b, ref_c, atol=5e-2, rtol=5e-2)

    # 3) Time-chunked streaming path (chunk does not divide T -> masked tail).
    fwd_chunked = jax.jit(functools.partial(dec_lstm_cnn_forward,
                                            compute_dtype=jnp.float32,
                                            time_chunk=3))
    out_ck, (h_ck, c_ck) = fwd_chunked(params, dec_w2v_embed, dec_ind_embed)
    jax.block_until_ready((out_ck, h_ck, c_ck))
    assert jnp.allclose(out_ck, ref_out, atol=1e-4, rtol=1e-4)
    assert jnp.allclose(h_ck, ref_h, atol=1e-4, rtol=1e-4)
    assert jnp.allclose(c_ck, ref_c, atol=1e-4, rtol=1e-4)

    print("KERNEL_OK")
</pallas_src>

<mosaic_0001>
module attributes {stable_mosaic.version = 11 : i64} {
  func.func @kernel(%arg0: i32, %arg1: memref<64x128xf32, #tpu.memory_space<vmem>>, %arg2: memref<2x32x128xf32, #tpu.memory_space<vmem>>, %arg3: memref<1x32x128xf32, #tpu.memory_space<vmem>>, %arg4: memref<1x1x128xf32, #tpu.memory_space<vmem>>, %arg5: memref<2x8x32xf32, #tpu.memory_space<vmem>>, %arg6: memref<2x8x32xf32, #tpu.memory_space<vmem>>, %arg7: memref<64x32xf32, #tpu.memory_space<vmem>>, %arg8: memref<2x8x32xf32, #tpu.memory_space<vmem>>, %arg9: memref<2x8x32xf32, #tpu.memory_space<vmem>>, %arg10: memref<2x8x32xf32, #tpu.memory_space<vmem>>, %arg11: memref<2x8x32xf32, #tpu.memory_space<vmem>>, %arg12: memref<64x32xf32, #tpu.memory_space<vmem>>, %arg13: memref<64x128xf32, #tpu.memory_space<vmem>>) attributes {dimension_semantics = [#tpu.dimension_semantics<arbitrary>], iteration_bounds = array<i64: 1>, scalar_prefetch = 0 : i64, scratch_operands = 4 : i64, tpu.core_type = #tpu.core_type<tc>, window_params = [{transform_indices = @transform_0, window_bounds = array<i64: 64, 128>}, {pipeline_mode = #tpu.pipeline_mode<synchronous>, transform_indices = @transform_1, window_bounds = array<i64: 2, 32, 128>}, {pipeline_mode = #tpu.pipeline_mode<synchronous>, transform_indices = @transform_2, window_bounds = array<i64: 1, 32, 128>}, {pipeline_mode = #tpu.pipeline_mode<synchronous>, transform_indices = @transform_3, window_bounds = array<i64: 1, 1, 128>}, {pipeline_mode = #tpu.pipeline_mode<synchronous>, transform_indices = @transform_4, window_bounds = array<i64: 2, 8, 32>}, {pipeline_mode = #tpu.pipeline_mode<synchronous>, transform_indices = @transform_5, window_bounds = array<i64: 2, 8, 32>}, {transform_indices = @transform_6, window_bounds = array<i64: 64, 32>}, {pipeline_mode = #tpu.pipeline_mode<synchronous>, transform_indices = @transform_7, window_bounds = array<i64: 2, 8, 32>}, {pipeline_mode = #tpu.pipeline_mode<synchronous>, transform_indices = @transform_8, window_bounds = array<i64: 2, 8, 32>}]} {
    %c0_i32 = arith.constant 0 : i32
    %0 = arith.cmpi eq, %arg0, %c0_i32 : i32
    %1 = arith.extui %0 : i1 to i32
    %c0_i32_0 = arith.constant 0 : i32
    %2 = arith.cmpi ne, %1, %c0_i32_0 : i32
    scf.if %2 {
      %c0_163 = arith.constant 0 : index
      %c0_164 = arith.constant 0 : index
      %c0_165 = arith.constant 0 : index
      %567 = vector.load %arg5[%c0_163, %c0_164, %c0_165] : memref<2x8x32xf32, #tpu.memory_space<vmem>>, vector<2x8x32xf32>
      %c0_166 = arith.constant 0 : index
      %c0_167 = arith.constant 0 : index
      %c0_168 = arith.constant 0 : index
      %568 = vector.load %arg10[%c0_166, %c0_167, %c0_168] : memref<2x8x32xf32, #tpu.memory_space<vmem>>, vector<2x8x32xf32>
      tpu.vector_store %arg10[%c0_166, %c0_167, %c0_168], %567 {strides = array<i32>} : memref<2x8x32xf32, #tpu.memory_space<vmem>>, vector<2x8x32xf32>,
      %c0_169 = arith.constant 0 : index
      %c0_170 = arith.constant 0 : index
      %c0_171 = arith.constant 0 : index
      %569 = vector.load %arg6[%c0_169, %c0_170, %c0_171] : memref<2x8x32xf32, #tpu.memory_space<vmem>>, vector<2x8x32xf32>
      %c0_172 = arith.constant 0 : index
      %c0_173 = arith.constant 0 : index
      %c0_174 = arith.constant 0 : index
      %570 = vector.load %arg11[%c0_172, %c0_173, %c0_174] : memref<2x8x32xf32, #tpu.memory_space<vmem>>, vector<2x8x32xf32>
      tpu.vector_store %arg11[%c0_172, %c0_173, %c0_174], %569 {strides = array<i32>} : memref<2x8x32xf32, #tpu.memory_space<vmem>>, vector<2x8x32xf32>,
    } else {
    }
    %c0 = arith.constant 0 : index
    %c0_1 = arith.constant 0 : index
    %c0_2 = arith.constant 0 : index
    %3 = vector.load %arg2[%c0, %c0_1, %c0_2] : memref<2x32x128xf32, #tpu.memory_space<vmem>>, vector<1x32x128xf32>
    %4 = vector.shape_cast %3 : vector<1x32x128xf32> to vector<32x128xf32>
    %c0_3 = arith.constant 0 : index
    %c0_4 = arith.constant 0 : index
    %c0_5 = arith.constant 0 : index
    %5 = vector.load %arg10[%c0_3, %c0_4, %c0_5] : memref<2x8x32xf32, #tpu.memory_space<vmem>>, vector<1x8x32xf32>
    %6 = vector.shape_cast %5 : vector<1x8x32xf32> to vector<8x32xf32>
    %c0_6 = arith.constant 0 : index
    %c0_7 = arith.constant 0 : index
    %c0_8 = arith.constant 0 : index
    %7 = vector.load %arg11[%c0_6, %c0_7, %c0_8] : memref<2x8x32xf32, #tpu.memory_space<vmem>>, vector<1x8x32xf32>
    %8 = vector.shape_cast %7 : vector<1x8x32xf32> to vector<8x32xf32>
    %c0_i32_9 = arith.constant 0 : i32
    %c8_i32 = arith.constant 8 : i32
    %9 = arith.muli %c0_i32_9, %c8_i32 : i32
    %10 = tpu.assume_multiple %9, 8 : i32
    %11 = arith.index_cast %10 : i32 to index
    %c0_10 = arith.constant 0 : index
    %12 = vector.load %arg1[%11, %c0_10] : memref<64x128xf32, #tpu.memory_space<vmem>>, vector<8x128xf32>
    %cst = arith.constant dense<0.000000e+00> : vector<8x128xf32>
    %13 = tpu.matmul %6, %4, %cst {dimension_numbers = #tpu.dot_dimension_numbers<[1], [0], [0], [1], [0, 0, 1, 1], [], []>} : vector<8x32xf32>, vector<32x128xf32>, vector<8x128xf32> -> vector<8x128xf32>
    %14 = arith.addf %12, %13 : vector<8x128xf32>
    %15 = vector.extract_strided_slice %14 {offsets = [0, 0], sizes = [8, 32], strides = [1, 1]} : vector<8x128xf32> to vector<8x32xf32>
    %16 = arith.negf %15 : vector<8x32xf32>
    %17 = math.exp %16 : vector<8x32xf32>
    %cst_11 = arith.constant 1.000000e+00 : f32
    %18 = vector.broadcast %cst_11 : f32 to vector<8x32xf32>
    %19 = arith.addf %18, %17 : vector<8x32xf32>
    %20 = arith.divf %18, %19 : vector<8x32xf32>
    %21 = vector.extract_strided_slice %14 {offsets = [0, 32], sizes = [8, 32], strides = [1, 1]} : vector<8x128xf32> to vector<8x32xf32>
    %22 = arith.negf %21 : vector<8x32xf32>
    %23 = math.exp %22 : vector<8x32xf32>
    %cst_12 = arith.constant 1.000000e+00 : f32
    %24 = vector.broadcast %cst_12 : f32 to vector<8x32xf32>
    %25 = arith.addf %24, %23 : vector<8x32xf32>
    %26 = arith.divf %24, %25 : vector<8x32xf32>
    %27 = vector.extract_strided_slice %14 {offsets = [0, 64], sizes = [8, 32], strides = [1, 1]} : vector<8x128xf32> to vector<8x32xf32>
    %28 = math.tanh %27 : vector<8x32xf32>
    %29 = vector.extract_strided_slice %14 {offsets = [0, 96], sizes = [8, 32], strides = [1, 1]} : vector<8x128xf32> to vector<8x32xf32>
    %30 = arith.negf %29 : vector<8x32xf32>
    %31 = math.exp %30 : vector<8x32xf32>
    %cst_13 = arith.constant 1.000000e+00 : f32
    %32 = vector.broadcast %cst_13 : f32 to vector<8x32xf32>
    %33 = arith.addf %32, %31 : vector<8x32xf32>
    %34 = arith.divf %32, %33 : vector<8x32xf32>
    %35 = arith.mulf %26, %8 : vector<8x32xf32>
    %36 = arith.mulf %20, %28 : vector<8x32xf32>
    %37 = arith.addf %35, %36 : vector<8x32xf32>
    %38 = math.tanh %37 : vector<8x32xf32>
    %39 = arith.mulf %34, %38 : vector<8x32xf32>
    %40 = arith.index_cast %10 : i32 to index
    %c0_14 = arith.constant 0 : index
    %41 = vector.load %arg12[%40, %c0_14] : memref<64x32xf32, #tpu.memory_space<vmem>>, vector<8x32xf32>
    tpu.vector_store %arg12[%40, %c0_14], %39 {strides = array<i32>} : memref<64x32xf32, #tpu.memory_space<vmem>>, vector<8x32xf32>,
    %c1_i32 = arith.constant 1 : i32
    %c8_i32_15 = arith.constant 8 : i32
    %42 = arith.muli %c1_i32, %c8_i32_15 : i32
    %43 = tpu.assume_multiple %42, 8 : i32
    %44 = arith.index_cast %43 : i32 to index
    %c0_16 = arith.constant 0 : index
    %45 = vector.load %arg1[%44, %c0_16] : memref<64x128xf32, #tpu.memory_space<vmem>>, vector<8x128xf32>
    %cst_17 = arith.constant dense<0.000000e+00> : vector<8x128xf32>
    %46 = tpu.matmul %39, %4, %cst_17 {dimension_numbers = #tpu.dot_dimension_numbers<[1], [0], [0], [1], [0, 0, 1, 1], [], []>} : vector<8x32xf32>, vector<32x128xf32>, vector<8x128xf32> -> vector<8x128xf32>
    %47 = arith.addf %45, %46 : vector<8x128xf32>
    %48 = vector.extract_strided_slice %47 {offsets = [0, 0], sizes = [8, 32], strides = [1, 1]} : vector<8x128xf32> to vector<8x32xf32>
    %49 = arith.negf %48 : vector<8x32xf32>
    %50 = math.exp %49 : vector<8x32xf32>
    %cst_18 = arith.constant 1.000000e+00 : f32
    %51 = vector.broadcast %cst_18 : f32 to vector<8x32xf32>
    %52 = arith.addf %51, %50 : vector<8x32xf32>
    %53 = arith.divf %51, %52 : vector<8x32xf32>
    %54 = vector.extract_strided_slice %47 {offsets = [0, 32], sizes = [8, 32], strides = [1, 1]} : vector<8x128xf32> to vector<8x32xf32>
    %55 = arith.negf %54 : vector<8x32xf32>
    %56 = math.exp %55 : vector<8x32xf32>
    %cst_19 = arith.constant 1.000000e+00 : f32
    %57 = vector.broadcast %cst_19 : f32 to vector<8x32xf32>
    %58 = arith.addf %57, %56 : vector<8x32xf32>
    %59 = arith.divf %57, %58 : vector<8x32xf32>
    %60 = vector.extract_strided_slice %47 {offsets = [0, 64], sizes = [8, 32], strides = [1, 1]} : vector<8x128xf32> to vector<8x32xf32>
    %61 = math.tanh %60 : vector<8x32xf32>
    %62 = vector.extract_strided_slice %47 {offsets = [0, 96], sizes = [8, 32], strides = [1, 1]} : vector<8x128xf32> to vector<8x32xf32>
    %63 = arith.negf %62 : vector<8x32xf32>
    %64 = math.exp %63 : vector<8x32xf32>
    %cst_20 = arith.constant 1.000000e+00 : f32
    %65 = vector.broadcast %cst_20 : f32 to vector<8x32xf32>
    %66 = arith.addf %65, %64 : vector<8x32xf32>
    %67 = arith.divf %65, %66 : vector<8x32xf32>
    %68 = arith.mulf %59, %37 : vector<8x32xf32>
    %69 = arith.mulf %53, %61 : vector<8x32xf32>
    %70 = arith.addf %68, %69 : vector<8x32xf32>
    %71 = math.tanh %70 : vector<8x32xf32>
    %72 = arith.mulf %67, %71 : vector<8x32xf32>
    %73 = arith.index_cast %43 : i32 to index
    %c0_21 = arith.constant 0 : index
    %74 = vector.load %arg12[%73, %c0_21] : memref<64x32xf32, #tpu.memory_space<vmem>>, vector<8x32xf32>
    tpu.vector_store %arg12[%73, %c0_21], %72 {strides = array<i32>} : memref<64x32xf32, #tpu.memory_space<vmem>>, vector<8x32xf32>,
    %c2_i32 = arith.constant 2 : i32
    %c8_i32_22 = arith.constant 8 : i32
    %75 = arith.muli %c2_i32, %c8_i32_22 : i32
    %76 = tpu.assume_multiple %75, 8 : i32
    %77 = arith.index_cast %76 : i32 to index
    %c0_23 = arith.constant 0 : index
    %78 = vector.load %arg1[%77, %c0_23] : memref<64x128xf32, #tpu.memory_space<vmem>>, vector<8x128xf32>
    %cst_24 = arith.constant dense<0.000000e+00> : vector<8x128xf32>
    %79 = tpu.matmul %72, %4, %cst_24 {dimension_numbers = #tpu.dot_dimension_numbers<[1], [0], [0], [1], [0, 0, 1, 1], [], []>} : vector<8x32xf32>, vector<32x128xf32>, vector<8x128xf32> -> vector<8x128xf32>
    %80 = arith.addf %78, %79 : vector<8x128xf32>
    %81 = vector.extract_strided_slice %80 {offsets = [0, 0], sizes = [8, 32], strides = [1, 1]} : vector<8x128xf32> to vector<8x32xf32>
    %82 = arith.negf %81 : vector<8x32xf32>
    %83 = math.exp %82 : vector<8x32xf32>
    %cst_25 = arith.constant 1.000000e+00 : f32
    %84 = vector.broadcast %cst_25 : f32 to vector<8x32xf32>
    %85 = arith.addf %84, %83 : vector<8x32xf32>
    %86 = arith.divf %84, %85 : vector<8x32xf32>
    %87 = vector.extract_strided_slice %80 {offsets = [0, 32], sizes = [8, 32], strides = [1, 1]} : vector<8x128xf32> to vector<8x32xf32>
    %88 = arith.negf %87 : vector<8x32xf32>
    %89 = math.exp %88 : vector<8x32xf32>
    %cst_26 = arith.constant 1.000000e+00 : f32
    %90 = vector.broadcast %cst_26 : f32 to vector<8x32xf32>
    %91 = arith.addf %90, %89 : vector<8x32xf32>
    %92 = arith.divf %90, %91 : vector<8x32xf32>
    %93 = vector.extract_strided_slice %80 {offsets = [0, 64], sizes = [8, 32], strides = [1, 1]} : vector<8x128xf32> to vector<8x32xf32>
    %94 = math.tanh %93 : vector<8x32xf32>
    %95 = vector.extract_strided_slice %80 {offsets = [0, 96], sizes = [8, 32], strides = [1, 1]} : vector<8x128xf32> to vector<8x32xf32>
    %96 = arith.negf %95 : vector<8x32xf32>
    %97 = math.exp %96 : vector<8x32xf32>
    %cst_27 = arith.constant 1.000000e+00 : f32
    %98 = vector.broadcast %cst_27 : f32 to vector<8x32xf32>
    %99 = arith.addf %98, %97 : vector<8x32xf32>
    %100 = arith.divf %98, %99 : vector<8x32xf32>
    %101 = arith.mulf %92, %70 : vector<8x32xf32>
    %102 = arith.mulf %86, %94 : vector<8x32xf32>
    %103 = arith.addf %101, %102 : vector<8x32xf32>
    %104 = math.tanh %103 : vector<8x32xf32>
    %105 = arith.mulf %100, %104 : vector<8x32xf32>
    %106 = arith.index_cast %76 : i32 to index
    %c0_28 = arith.constant 0 : index
    %107 = vector.load %arg12[%106, %c0_28] : memref<64x32xf32, #tpu.memory_space<vmem>>, vector<8x32xf32>
    tpu.vector_store %arg12[%106, %c0_28], %105 {strides = array<i32>} : memref<64x32xf32, #tpu.memory_space<vmem>>, vector<8x32xf32>,
    %c3_i32 = arith.constant 3 : i32
    %c8_i32_29 = arith.constant 8 : i32
    %108 = arith.muli %c3_i32, %c8_i32_29 : i32
    %109 = tpu.assume_multiple %108, 8 : i32
    %110 = arith.index_cast %109 : i32 to index
    %c0_30 = arith.constant 0 : index
    %111 = vector.load %arg1[%110, %c0_30] : memref<64x128xf32, #tpu.memory_space<vmem>>, vector<8x128xf32>
    %cst_31 = arith.constant dense<0.000000e+00> : vector<8x128xf32>
    %112 = tpu.matmul %105, %4, %cst_31 {dimension_numbers = #tpu.dot_dimension_numbers<[1], [0], [0], [1], [0, 0, 1, 1], [], []>} : vector<8x32xf32>, vector<32x128xf32>, vector<8x128xf32> -> vector<8x128xf32>
    %113 = arith.addf %111, %112 : vector<8x128xf32>
    %114 = vector.extract_strided_slice %113 {offsets = [0, 0], sizes = [8, 32], strides = [1, 1]} : vector<8x128xf32> to vector<8x32xf32>
    %115 = arith.negf %114 : vector<8x32xf32>
    %116 = math.exp %115 : vector<8x32xf32>
    %cst_32 = arith.constant 1.000000e+00 : f32
    %117 = vector.broadcast %cst_32 : f32 to vector<8x32xf32>
    %118 = arith.addf %117, %116 : vector<8x32xf32>
    %119 = arith.divf %117, %118 : vector<8x32xf32>
    %120 = vector.extract_strided_slice %113 {offsets = [0, 32], sizes = [8, 32], strides = [1, 1]} : vector<8x128xf32> to vector<8x32xf32>
    %121 = arith.negf %120 : vector<8x32xf32>
    %122 = math.exp %121 : vector<8x32xf32>
    %cst_33 = arith.constant 1.000000e+00 : f32
    %123 = vector.broadcast %cst_33 : f32 to vector<8x32xf32>
    %124 = arith.addf %123, %122 : vector<8x32xf32>
    %125 = arith.divf %123, %124 : vector<8x32xf32>
    %126 = vector.extract_strided_slice %113 {offsets = [0, 64], sizes = [8, 32], strides = [1, 1]} : vector<8x128xf32> to vector<8x32xf32>
    %127 = math.tanh %126 : vector<8x32xf32>
    %128 = vector.extract_strided_slice %113 {offsets = [0, 96], sizes = [8, 32], strides = [1, 1]} : vector<8x128xf32> to vector<8x32xf32>
    %129 = arith.negf %128 : vector<8x32xf32>
    %130 = math.exp %129 : vector<8x32xf32>
    %cst_34 = arith.constant 1.000000e+00 : f32
    %131 = vector.broadcast %cst_34 : f32 to vector<8x32xf32>
    %132 = arith.addf %131, %130 : vector<8x32xf32>
    %133 = arith.divf %131, %132 : vector<8x32xf32>
    %134 = arith.mulf %125, %103 : vector<8x32xf32>
    %135 = arith.mulf %119, %127 : vector<8x32xf32>
    %136 = arith.addf %134, %135 : vector<8x32xf32>
    %137 = math.tanh %136 : vector<8x32xf32>
    %138 = arith.mulf %133, %137 : vector<8x32xf32>
    %139 = arith.index_cast %109 : i32 to index
    %c0_35 = arith.constant 0 : index
    %140 = vector.load %arg12[%139, %c0_35] : memref<64x32xf32, #tpu.memory_space<vmem>>, vector<8x32xf32>
    tpu.vector_store %arg12[%139, %c0_35], %138 {strides = array<i32>} : memref<64x32xf32, #tpu.memory_space<vmem>>, vector<8x32xf32>,
    %c4_i32 = arith.constant 4 : i32
    %c8_i32_36 = arith.constant 8 : i32
    %141 = arith.muli %c4_i32, %c8_i32_36 : i32
    %142 = tpu.assume_multiple %141, 8 : i32
    %143 = arith.index_cast %142 : i32 to index
    %c0_37 = arith.constant 0 : index
    %144 = vector.load %arg1[%143, %c0_37] : memref<64x128xf32, #tpu.memory_space<vmem>>, vector<8x128xf32>
    %cst_38 = arith.constant dense<0.000000e+00> : vector<8x128xf32>
    %145 = tpu.matmul %138, %4, %cst_38 {dimension_numbers = #tpu.dot_dimension_numbers<[1], [0], [0], [1], [0, 0, 1, 1], [], []>} : vector<8x32xf32>, vector<32x128xf32>, vector<8x128xf32> -> vector<8x128xf32>
    %146 = arith.addf %144, %145 : vector<8x128xf32>
    %147 = vector.extract_strided_slice %146 {offsets = [0, 0], sizes = [8, 32], strides = [1, 1]} : vector<8x128xf32> to vector<8x32xf32>
    %148 = arith.negf %147 : vector<8x32xf32>
    %149 = math.exp %148 : vector<8x32xf32>
    %cst_39 = arith.constant 1.000000e+00 : f32
    %150 = vector.broadcast %cst_39 : f32 to vector<8x32xf32>
    %151 = arith.addf %150, %149 : vector<8x32xf32>
    %152 = arith.divf %150, %151 : vector<8x32xf32>
    %153 = vector.extract_strided_slice %146 {offsets = [0, 32], sizes = [8, 32], strides = [1, 1]} : vector<8x128xf32> to vector<8x32xf32>
    %154 = arith.negf %153 : vector<8x32xf32>
    %155 = math.exp %154 : vector<8x32xf32>
    %cst_40 = arith.constant 1.000000e+00 : f32
    %156 = vector.broadcast %cst_40 : f32 to vector<8x32xf32>
    %157 = arith.addf %156, %155 : vector<8x32xf32>
    %158 = arith.divf %156, %157 : vector<8x32xf32>
    %159 = vector.extract_strided_slice %146 {offsets = [0, 64], sizes = [8, 32], strides = [1, 1]} : vector<8x128xf32> to vector<8x32xf32>
    %160 = math.tanh %159 : vector<8x32xf32>
    %161 = vector.extract_strided_slice %146 {offsets = [0, 96], sizes = [8, 32], strides = [1, 1]} : vector<8x128xf32> to vector<8x32xf32>
    %162 = arith.negf %161 : vector<8x32xf32>
    %163 = math.exp %162 : vector<8x32xf32>
    %cst_41 = arith.constant 1.000000e+00 : f32
    %164 = vector.broadcast %cst_41 : f32 to vector<8x32xf32>
    %165 = arith.addf %164, %163 : vector<8x32xf32>
    %166 = arith.divf %164, %165 : vector<8x32xf32>
    %167 = arith.mulf %158, %136 : vector<8x32xf32>
    %168 = arith.mulf %152, %160 : vector<8x32xf32>
    %169 = arith.addf %167, %168 : vector<8x32xf32>
    %170 = math.tanh %169 : vector<8x32xf32>
    %171 = arith.mulf %166, %170 : vector<8x32xf32>
    %172 = arith.index_cast %142 : i32 to index
    %c0_42 = arith.constant 0 : index
    %173 = vector.load %arg12[%172, %c0_42] : memref<64x32xf32, #tpu.memory_space<vmem>>, vector<8x32xf32>
    tpu.vector_store %arg12[%172, %c0_42], %171 {strides = array<i32>} : memref<64x32xf32, #tpu.memory_space<vmem>>, vector<8x32xf32>,
    %c5_i32 = arith.constant 5 : i32
    %c8_i32_43 = arith.constant 8 : i32
    %174 = arith.muli %c5_i32, %c8_i32_43 : i32
    %175 = tpu.assume_multiple %174, 8 : i32
    %176 = arith.index_cast %175 : i32 to index
    %c0_44 = arith.constant 0 : index
    %177 = vector.load %arg1[%176, %c0_44] : memref<64x128xf32, #tpu.memory_space<vmem>>, vector<8x128xf32>
    %cst_45 = arith.constant dense<0.000000e+00> : vector<8x128xf32>
    %178 = tpu.matmul %171, %4, %cst_45 {dimension_numbers = #tpu.dot_dimension_numbers<[1], [0], [0], [1], [0, 0, 1, 1], [], []>} : vector<8x32xf32>, vector<32x128xf32>, vector<8x128xf32> -> vector<8x128xf32>
    %179 = arith.addf %177, %178 : vector<8x128xf32>
    %180 = vector.extract_strided_slice %179 {offsets = [0, 0], sizes = [8, 32], strides = [1, 1]} : vector<8x128xf32> to vector<8x32xf32>
    %181 = arith.negf %180 : vector<8x32xf32>
    %182 = math.exp %181 : vector<8x32xf32>
    %cst_46 = arith.constant 1.000000e+00 : f32
    %183 = vector.broadcast %cst_46 : f32 to vector<8x32xf32>
    %184 = arith.addf %183, %182 : vector<8x32xf32>
    %185 = arith.divf %183, %184 : vector<8x32xf32>
    %186 = vector.extract_strided_slice %179 {offsets = [0, 32], sizes = [8, 32], strides = [1, 1]} : vector<8x128xf32> to vector<8x32xf32>
    %187 = arith.negf %186 : vector<8x32xf32>
    %188 = math.exp %187 : vector<8x32xf32>
    %cst_47 = arith.constant 1.000000e+00 : f32
    %189 = vector.broadcast %cst_47 : f32 to vector<8x32xf32>
    %190 = arith.addf %189, %188 : vector<8x32xf32>
    %191 = arith.divf %189, %190 : vector<8x32xf32>
    %192 = vector.extract_strided_slice %179 {offsets = [0, 64], sizes = [8, 32], strides = [1, 1]} : vector<8x128xf32> to vector<8x32xf32>
    %193 = math.tanh %192 : vector<8x32xf32>
    %194 = vector.extract_strided_slice %179 {offsets = [0, 96], sizes = [8, 32], strides = [1, 1]} : vector<8x128xf32> to vector<8x32xf32>
    %195 = arith.negf %194 : vector<8x32xf32>
    %196 = math.exp %195 : vector<8x32xf32>
    %cst_48 = arith.constant 1.000000e+00 : f32
    %197 = vector.broadcast %cst_48 : f32 to vector<8x32xf32>
    %198 = arith.addf %197, %196 : vector<8x32xf32>
    %199 = arith.divf %197, %198 : vector<8x32xf32>
    %200 = arith.mulf %191, %169 : vector<8x32xf32>
    %201 = arith.mulf %185, %193 : vector<8x32xf32>
    %202 = arith.addf %200, %201 : vector<8x32xf32>
    %203 = math.tanh %202 : vector<8x32xf32>
    %204 = arith.mulf %199, %203 : vector<8x32xf32>
    %205 = arith.index_cast %175 : i32 to index
    %c0_49 = arith.constant 0 : index
    %206 = vector.load %arg12[%205, %c0_49] : memref<64x32xf32, #tpu.memory_space<vmem>>, vector<8x32xf32>
    tpu.vector_store %arg12[%205, %c0_49], %204 {strides = array<i32>} : memref<64x32xf32, #tpu.memory_space<vmem>>, vector<8x32xf32>,
    %c6_i32 = arith.constant 6 : i32
    %c8_i32_50 = arith.constant 8 : i32
    %207 = arith.muli %c6_i32, %c8_i32_50 : i32
    %208 = tpu.assume_multiple %207, 8 : i32
    %209 = arith.index_cast %208 : i32 to index
    %c0_51 = arith.constant 0 : index
    %210 = vector.load %arg1[%209, %c0_51] : memref<64x128xf32, #tpu.memory_space<vmem>>, vector<8x128xf32>
    %cst_52 = arith.constant dense<0.000000e+00> : vector<8x128xf32>
    %211 = tpu.matmul %204, %4, %cst_52 {dimension_numbers = #tpu.dot_dimension_numbers<[1], [0], [0], [1], [0, 0, 1, 1], [], []>} : vector<8x32xf32>, vector<32x128xf32>, vector<8x128xf32> -> vector<8x128xf32>
    %212 = arith.addf %210, %211 : vector<8x128xf32>
    %213 = vector.extract_strided_slice %212 {offsets = [0, 0], sizes = [8, 32], strides = [1, 1]} : vector<8x128xf32> to vector<8x32xf32>
    %214 = arith.negf %213 : vector<8x32xf32>
    %215 = math.exp %214 : vector<8x32xf32>
    %cst_53 = arith.constant 1.000000e+00 : f32
    %216 = vector.broadcast %cst_53 : f32 to vector<8x32xf32>
    %217 = arith.addf %216, %215 : vector<8x32xf32>
    %218 = arith.divf %216, %217 : vector<8x32xf32>
    %219 = vector.extract_strided_slice %212 {offsets = [0, 32], sizes = [8, 32], strides = [1, 1]} : vector<8x128xf32> to vector<8x32xf32>
    %220 = arith.negf %219 : vector<8x32xf32>
    %221 = math.exp %220 : vector<8x32xf32>
    %cst_54 = arith.constant 1.000000e+00 : f32
    %222 = vector.broadcast %cst_54 : f32 to vector<8x32xf32>
    %223 = arith.addf %222, %221 : vector<8x32xf32>
    %224 = arith.divf %222, %223 : vector<8x32xf32>
    %225 = vector.extract_strided_slice %212 {offsets = [0, 64], sizes = [8, 32], strides = [1, 1]} : vector<8x128xf32> to vector<8x32xf32>
    %226 = math.tanh %225 : vector<8x32xf32>
    %227 = vector.extract_strided_slice %212 {offsets = [0, 96], sizes = [8, 32], strides = [1, 1]} : vector<8x128xf32> to vector<8x32xf32>
    %228 = arith.negf %227 : vector<8x32xf32>
    %229 = math.exp %228 : vector<8x32xf32>
    %cst_55 = arith.constant 1.000000e+00 : f32
    %230 = vector.broadcast %cst_55 : f32 to vector<8x32xf32>
    %231 = arith.addf %230, %229 : vector<8x32xf32>
    %232 = arith.divf %230, %231 : vector<8x32xf32>
    %233 = arith.mulf %224, %202 : vector<8x32xf32>
    %234 = arith.mulf %218, %226 : vector<8x32xf32>
    %235 = arith.addf %233, %234 : vector<8x32xf32>
    %236 = math.tanh %235 : vector<8x32xf32>
    %237 = arith.mulf %232, %236 : vector<8x32xf32>
    %238 = arith.index_cast %208 : i32 to index
    %c0_56 = arith.constant 0 : index
    %239 = vector.load %arg12[%238, %c0_56] : memref<64x32xf32, #tpu.memory_space<vmem>>, vector<8x32xf32>
    tpu.vector_store %arg12[%238, %c0_56], %237 {strides = array<i32>} : memref<64x32xf32, #tpu.memory_space<vmem>>, vector<8x32xf32>,
    %c7_i32 = arith.constant 7 : i32
    %c8_i32_57 = arith.constant 8 : i32
    %240 = arith.muli %c7_i32, %c8_i32_57 : i32
    %241 = tpu.assume_multiple %240, 8 : i32
    %242 = arith.index_cast %241 : i32 to index
    %c0_58 = arith.constant 0 : index
    %243 = vector.load %arg1[%242, %c0_58] : memref<64x128xf32, #tpu.memory_space<vmem>>, vector<8x128xf32>
    %cst_59 = arith.constant dense<0.000000e+00> : vector<8x128xf32>
    %244 = tpu.matmul %237, %4, %cst_59 {dimension_numbers = #tpu.dot_dimension_numbers<[1], [0], [0], [1], [0, 0, 1, 1], [], []>} : vector<8x32xf32>, vector<32x128xf32>, vector<8x128xf32> -> vector<8x128xf32>
    %245 = arith.addf %243, %244 : vector<8x128xf32>
    %246 = vector.extract_strided_slice %245 {offsets = [0, 0], sizes = [8, 32], strides = [1, 1]} : vector<8x128xf32> to vector<8x32xf32>
    %247 = arith.negf %246 : vector<8x32xf32>
    %248 = math.exp %247 : vector<8x32xf32>
    %cst_60 = arith.constant 1.000000e+00 : f32
    %249 = vector.broadcast %cst_60 : f32 to vector<8x32xf32>
    %250 = arith.addf %249, %248 : vector<8x32xf32>
    %251 = arith.divf %249, %250 : vector<8x32xf32>
    %252 = vector.extract_strided_slice %245 {offsets = [0, 32], sizes = [8, 32], strides = [1, 1]} : vector<8x128xf32> to vector<8x32xf32>
    %253 = arith.negf %252 : vector<8x32xf32>
    %254 = math.exp %253 : vector<8x32xf32>
    %cst_61 = arith.constant 1.000000e+00 : f32
    %255 = vector.broadcast %cst_61 : f32 to vector<8x32xf32>
    %256 = arith.addf %255, %254 : vector<8x32xf32>
    %257 = arith.divf %255, %256 : vector<8x32xf32>
    %258 = vector.extract_strided_slice %245 {offsets = [0, 64], sizes = [8, 32], strides = [1, 1]} : vector<8x128xf32> to vector<8x32xf32>
    %259 = math.tanh %258 : vector<8x32xf32>
    %260 = vector.extract_strided_slice %245 {offsets = [0, 96], sizes = [8, 32], strides = [1, 1]} : vector<8x128xf32> to vector<8x32xf32>
    %261 = arith.negf %260 : vector<8x32xf32>
    %262 = math.exp %261 : vector<8x32xf32>
    %cst_62 = arith.constant 1.000000e+00 : f32
    %263 = vector.broadcast %cst_62 : f32 to vector<8x32xf32>
    %264 = arith.addf %263, %262 : vector<8x32xf32>
    %265 = arith.divf %263, %264 : vector<8x32xf32>
    %266 = arith.mulf %257, %235 : vector<8x32xf32>
    %267 = arith.mulf %251, %259 : vector<8x32xf32>
    %268 = arith.addf %266, %267 : vector<8x32xf32>
    %269 = math.tanh %268 : vector<8x32xf32>
    %270 = arith.mulf %265, %269 : vector<8x32xf32>
    %271 = arith.index_cast %241 : i32 to index
    %c0_63 = arith.constant 0 : index
    %272 = vector.load %arg12[%271, %c0_63] : memref<64x32xf32, #tpu.memory_space<vmem>>, vector<8x32xf32>
    tpu.vector_store %arg12[%271, %c0_63], %270 {strides = array<i32>} : memref<64x32xf32, #tpu.memory_space<vmem>>, vector<8x32xf32>,
    %c8_i32_64 = arith.constant 8 : i32
    %c0_65 = arith.constant 0 : index
    %c0_66 = arith.constant 0 : index
    %c0_67 = arith.constant 0 : index
    %273 = vector.load %arg10[%c0_65, %c0_66, %c0_67] : memref<2x8x32xf32, #tpu.memory_space<vmem>>, vector<1x8x32xf32>
    %274 = vector.shape_cast %273 : vector<1x8x32xf32> to vector<8x32xf32>
    %275 = vector.shape_cast %270 : vector<8x32xf32> to vector<1x8x32xf32>
    tpu.vector_store %arg10[%c0_65, %c0_66, %c0_67], %275 {strides = array<i32>} : memref<2x8x32xf32, #tpu.memory_space<vmem>>, vector<1x8x32xf32>,
    %c0_68 = arith.constant 0 : index
    %c0_69 = arith.constant 0 : index
    %c0_70 = arith.constant 0 : index
    %276 = vector.load %arg11[%c0_68, %c0_69, %c0_70] : memref<2x8x32xf32, #tpu.memory_space<vmem>>, vector<1x8x32xf32>
    %277 = vector.shape_cast %276 : vector<1x8x32xf32> to vector<8x32xf32>
    %278 = vector.shape_cast %268 : vector<8x32xf32> to vector<1x8x32xf32>
    tpu.vector_store %arg11[%c0_68, %c0_69, %c0_70], %278 {strides = array<i32>} : memref<2x8x32xf32, #tpu.memory_space<vmem>>, vector<1x8x32xf32>,
    %c0_71 = arith.constant 0 : index
    %c0_72 = arith.constant 0 : index
    %279 = vector.load %arg12[%c0_71, %c0_72] : memref<64x32xf32, #tpu.memory_space<vmem>>, vector<64x32xf32>
    %c0_73 = arith.constant 0 : index
    %c0_74 = arith.constant 0 : index
    %c0_75 = arith.constant 0 : index
    %280 = vector.load %arg3[%c0_73, %c0_74, %c0_75] : memref<1x32x128xf32, #tpu.memory_space<vmem>>, vector<1x32x128xf32>
    %281 = vector.shape_cast %280 : vector<1x32x128xf32> to vector<32x128xf32>
    %cst_76 = arith.constant dense<0.000000e+00> : vector<64x128xf32>
    %282 = tpu.matmul %279, %281, %cst_76 {dimension_numbers = #tpu.dot_dimension_numbers<[1], [0], [0], [1], [0, 0, 1, 1], [], []>} : vector<64x32xf32>, vector<32x128xf32>, vector<64x128xf32> -> vector<64x128xf32>
    %c0_77 = arith.constant 0 : index
    %c0_78 = arith.constant 0 : index
    %c0_79 = arith.constant 0 : index
    %283 = vector.load %arg4[%c0_77, %c0_78, %c0_79] : memref<1x1x128xf32, #tpu.memory_space<vmem>>, vector<1x1x128xf32>
    %284 = vector.shape_cast %283 : vector<1x1x128xf32> to vector<1x128xf32>
    %285 = vector.broadcast %284 : vector<1x128xf32> to vector<64x128xf32>
    %286 = arith.addf %282, %285 : vector<64x128xf32>
    %c0_80 = arith.constant 0 : index
    %c0_81 = arith.constant 0 : index
    %287 = vector.load %arg13[%c0_80, %c0_81] : memref<64x128xf32, #tpu.memory_space<vmem>>, vector<64x128xf32>
    tpu.vector_store %arg13[%c0_80, %c0_81], %286 {strides = array<i32>} : memref<64x128xf32, #tpu.memory_space<vmem>>, vector<64x128xf32>,
    %c1 = arith.constant 1 : index
    %c0_82 = arith.constant 0 : index
    %c0_83 = arith.constant 0 : index
    %288 = vector.load %arg2[%c1, %c0_82, %c0_83] : memref<2x32x128xf32, #tpu.memory_space<vmem>>, vector<1x32x128xf32>
    %289 = vector.shape_cast %288 : vector<1x32x128xf32> to vector<32x128xf32>
    %c1_84 = arith.constant 1 : index
    %c0_85 = arith.constant 0 : index
    %c0_86 = arith.constant 0 : index
    %290 = vector.load %arg10[%c1_84, %c0_85, %c0_86] : memref<2x8x32xf32, #tpu.memory_space<vmem>>, vector<1x8x32xf32>
    %291 = vector.shape_cast %290 : vector<1x8x32xf32> to vector<8x32xf32>
    %c1_87 = arith.constant 1 : index
    %c0_88 = arith.constant 0 : index
    %c0_89 = arith.constant 0 : index
    %292 = vector.load %arg11[%c1_87, %c0_88, %c0_89] : memref<2x8x32xf32, #tpu.memory_space<vmem>>, vector<1x8x32xf32>
    %293 = vector.shape_cast %292 : vector<1x8x32xf32> to vector<8x32xf32>
    %c0_i32_90 = arith.constant 0 : i32
    %c8_i32_91 = arith.constant 8 : i32
    %294 = arith.muli %c0_i32_90, %c8_i32_91 : i32
    %295 = tpu.assume_multiple %294, 8 : i32
    %296 = arith.index_cast %295 : i32 to index
    %c0_92 = arith.constant 0 : index
    %297 = vector.load %arg13[%296, %c0_92] : memref<64x128xf32, #tpu.memory_space<vmem>>, vector<8x128xf32>
    %cst_93 = arith.constant dense<0.000000e+00> : vector<8x128xf32>
    %298 = tpu.matmul %291, %289, %cst_93 {dimension_numbers = #tpu.dot_dimension_numbers<[1], [0], [0], [1], [0, 0, 1, 1], [], []>} : vector<8x32xf32>, vector<32x128xf32>, vector<8x128xf32> -> vector<8x128xf32>
    %299 = arith.addf %297, %298 : vector<8x128xf32>
    %300 = vector.extract_strided_slice %299 {offsets = [0, 0], sizes = [8, 32], strides = [1, 1]} : vector<8x128xf32> to vector<8x32xf32>
    %301 = arith.negf %300 : vector<8x32xf32>
    %302 = math.exp %301 : vector<8x32xf32>
    %cst_94 = arith.constant 1.000000e+00 : f32
    %303 = vector.broadcast %cst_94 : f32 to vector<8x32xf32>
    %304 = arith.addf %303, %302 : vector<8x32xf32>
    %305 = arith.divf %303, %304 : vector<8x32xf32>
    %306 = vector.extract_strided_slice %299 {offsets = [0, 32], sizes = [8, 32], strides = [1, 1]} : vector<8x128xf32> to vector<8x32xf32>
    %307 = arith.negf %306 : vector<8x32xf32>
    %308 = math.exp %307 : vector<8x32xf32>
    %cst_95 = arith.constant 1.000000e+00 : f32
    %309 = vector.broadcast %cst_95 : f32 to vector<8x32xf32>
    %310 = arith.addf %309, %308 : vector<8x32xf32>
    %311 = arith.divf %309, %310 : vector<8x32xf32>
    %312 = vector.extract_strided_slice %299 {offsets = [0, 64], sizes = [8, 32], strides = [1, 1]} : vector<8x128xf32> to vector<8x32xf32>
    %313 = math.tanh %312 : vector<8x32xf32>
    %314 = vector.extract_strided_slice %299 {offsets = [0, 96], sizes = [8, 32], strides = [1, 1]} : vector<8x128xf32> to vector<8x32xf32>
    %315 = arith.negf %314 : vector<8x32xf32>
    %316 = math.exp %315 : vector<8x32xf32>
    %cst_96 = arith.constant 1.000000e+00 : f32
    %317 = vector.broadcast %cst_96 : f32 to vector<8x32xf32>
    %318 = arith.addf %317, %316 : vector<8x32xf32>
    %319 = arith.divf %317, %318 : vector<8x32xf32>
    %320 = arith.mulf %311, %293 : vector<8x32xf32>
    %321 = arith.mulf %305, %313 : vector<8x32xf32>
    %322 = arith.addf %320, %321 : vector<8x32xf32>
    %323 = math.tanh %322 : vector<8x32xf32>
    %324 = arith.mulf %319, %323 : vector<8x32xf32>
    %325 = arith.index_cast %295 : i32 to index
    %c0_97 = arith.constant 0 : index
    %326 = vector.load %arg7[%325, %c0_97] : memref<64x32xf32, #tpu.memory_space<vmem>>, vector<8x32xf32>
    tpu.vector_store %arg7[%325, %c0_97], %324 {strides = array<i32>} : memref<64x32xf32, #tpu.memory_space<vmem>>, vector<8x32xf32>,
    %c1_i32_98 = arith.constant 1 : i32
    %c8_i32_99 = arith.constant 8 : i32
    %327 = arith.muli %c1_i32_98, %c8_i32_99 : i32
    %328 = tpu.assume_multiple %327, 8 : i32
    %329 = arith.index_cast %328 : i32 to index
    %c0_100 = arith.constant 0 : index
    %330 = vector.load %arg13[%329, %c0_100] : memref<64x128xf32, #tpu.memory_space<vmem>>, vector<8x128xf32>
    %cst_101 = arith.constant dense<0.000000e+00> : vector<8x128xf32>
    %331 = tpu.matmul %324, %289, %cst_101 {dimension_numbers = #tpu.dot_dimension_numbers<[1], [0], [0], [1], [0, 0, 1, 1], [], []>} : vector<8x32xf32>, vector<32x128xf32>, vector<8x128xf32> -> vector<8x128xf32>
    %332 = arith.addf %330, %331 : vector<8x128xf32>
    %333 = vector.extract_strided_slice %332 {offsets = [0, 0], sizes = [8, 32], strides = [1, 1]} : vector<8x128xf32> to vector<8x32xf32>
    %334 = arith.negf %333 : vector<8x32xf32>
    %335 = math.exp %334 : vector<8x32xf32>
    %cst_102 = arith.constant 1.000000e+00 : f32
    %336 = vector.broadcast %cst_102 : f32 to vector<8x32xf32>
    %337 = arith.addf %336, %335 : vector<8x32xf32>
    %338 = arith.divf %336, %337 : vector<8x32xf32>
    %339 = vector.extract_strided_slice %332 {offsets = [0, 32], sizes = [8, 32], strides = [1, 1]} : vector<8x128xf32> to vector<8x32xf32>
    %340 = arith.negf %339 : vector<8x32xf32>
    %341 = math.exp %340 : vector<8x32xf32>
    %cst_103 = arith.constant 1.000000e+00 : f32
    %342 = vector.broadcast %cst_103 : f32 to vector<8x32xf32>
    %343 = arith.addf %342, %341 : vector<8x32xf32>
    %344 = arith.divf %342, %343 : vector<8x32xf32>
    %345 = vector.extract_strided_slice %332 {offsets = [0, 64], sizes = [8, 32], strides = [1, 1]} : vector<8x128xf32> to vector<8x32xf32>
    %346 = math.tanh %345 : vector<8x32xf32>
    %347 = vector.extract_strided_slice %332 {offsets = [0, 96], sizes = [8, 32], strides = [1, 1]} : vector<8x128xf32> to vector<8x32xf32>
    %348 = arith.negf %347 : vector<8x32xf32>
    %349 = math.exp %348 : vector<8x32xf32>
    %cst_104 = arith.constant 1.000000e+00 : f32
    %350 = vector.broadcast %cst_104 : f32 to vector<8x32xf32>
    %351 = arith.addf %350, %349 : vector<8x32xf32>
    %352 = arith.divf %350, %351 : vector<8x32xf32>
    %353 = arith.mulf %344, %322 : vector<8x32xf32>
    %354 = arith.mulf %338, %346 : vector<8x32xf32>
    %355 = arith.addf %353, %354 : vector<8x32xf32>
    %356 = math.tanh %355 : vector<8x32xf32>
    %357 = arith.mulf %352, %356 : vector<8x32xf32>
    %358 = arith.index_cast %328 : i32 to index
    %c0_105 = arith.constant 0 : index
    %359 = vector.load %arg7[%358, %c0_105] : memref<64x32xf32, #tpu.memory_space<vmem>>, vector<8x32xf32>
    tpu.vector_store %arg7[%358, %c0_105], %357 {strides = array<i32>} : memref<64x32xf32, #tpu.memory_space<vmem>>, vector<8x32xf32>,
    %c2_i32_106 = arith.constant 2 : i32
    %c8_i32_107 = arith.constant 8 : i32
    %360 = arith.muli %c2_i32_106, %c8_i32_107 : i32
    %361 = tpu.assume_multiple %360, 8 : i32
    %362 = arith.index_cast %361 : i32 to index
    %c0_108 = arith.constant 0 : index
    %363 = vector.load %arg13[%362, %c0_108] : memref<64x128xf32, #tpu.memory_space<vmem>>, vector<8x128xf32>
    %cst_109 = arith.constant dense<0.000000e+00> : vector<8x128xf32>
    %364 = tpu.matmul %357, %289, %cst_109 {dimension_numbers = #tpu.dot_dimension_numbers<[1], [0], [0], [1], [0, 0, 1, 1], [], []>} : vector<8x32xf32>, vector<32x128xf32>, vector<8x128xf32> -> vector<8x128xf32>
    %365 = arith.addf %363, %364 : vector<8x128xf32>
    %366 = vector.extract_strided_slice %365 {offsets = [0, 0], sizes = [8, 32], strides = [1, 1]} : vector<8x128xf32> to vector<8x32xf32>
    %367 = arith.negf %366 : vector<8x32xf32>
    %368 = math.exp %367 : vector<8x32xf32>
    %cst_110 = arith.constant 1.000000e+00 : f32
    %369 = vector.broadcast %cst_110 : f32 to vector<8x32xf32>
    %370 = arith.addf %369, %368 : vector<8x32xf32>
    %371 = arith.divf %369, %370 : vector<8x32xf32>
    %372 = vector.extract_strided_slice %365 {offsets = [0, 32], sizes = [8, 32], strides = [1, 1]} : vector<8x128xf32> to vector<8x32xf32>
    %373 = arith.negf %372 : vector<8x32xf32>
    %374 = math.exp %373 : vector<8x32xf32>
    %cst_111 = arith.constant 1.000000e+00 : f32
    %375 = vector.broadcast %cst_111 : f32 to vector<8x32xf32>
    %376 = arith.addf %375, %374 : vector<8x32xf32>
    %377 = arith.divf %375, %376 : vector<8x32xf32>
    %378 = vector.extract_strided_slice %365 {offsets = [0, 64], sizes = [8, 32], strides = [1, 1]} : vector<8x128xf32> to vector<8x32xf32>
    %379 = math.tanh %378 : vector<8x32xf32>
    %380 = vector.extract_strided_slice %365 {offsets = [0, 96], sizes = [8, 32], strides = [1, 1]} : vector<8x128xf32> to vector<8x32xf32>
    %381 = arith.negf %380 : vector<8x32xf32>
    %382 = math.exp %381 : vector<8x32xf32>
    %cst_112 = arith.constant 1.000000e+00 : f32
    %383 = vector.broadcast %cst_112 : f32 to vector<8x32xf32>
    %384 = arith.addf %383, %382 : vector<8x32xf32>
    %385 = arith.divf %383, %384 : vector<8x32xf32>
    %386 = arith.mulf %377, %355 : vector<8x32xf32>
    %387 = arith.mulf %371, %379 : vector<8x32xf32>
    %388 = arith.addf %386, %387 : vector<8x32xf32>
    %389 = math.tanh %388 : vector<8x32xf32>
    %390 = arith.mulf %385, %389 : vector<8x32xf32>
    %391 = arith.index_cast %361 : i32 to index
    %c0_113 = arith.constant 0 : index
    %392 = vector.load %arg7[%391, %c0_113] : memref<64x32xf32, #tpu.memory_space<vmem>>, vector<8x32xf32>
    tpu.vector_store %arg7[%391, %c0_113], %390 {strides = array<i32>} : memref<64x32xf32, #tpu.memory_space<vmem>>, vector<8x32xf32>,
    %c3_i32_114 = arith.constant 3 : i32
    %c8_i32_115 = arith.constant 8 : i32
    %393 = arith.muli %c3_i32_114, %c8_i32_115 : i32
    %394 = tpu.assume_multiple %393, 8 : i32
    %395 = arith.index_cast %394 : i32 to index
    %c0_116 = arith.constant 0 : index
    %396 = vector.load %arg13[%395, %c0_116] : memref<64x128xf32, #tpu.memory_space<vmem>>, vector<8x128xf32>
    %cst_117 = arith.constant dense<0.000000e+00> : vector<8x128xf32>
    %397 = tpu.matmul %390, %289, %cst_117 {dimension_numbers = #tpu.dot_dimension_numbers<[1], [0], [0], [1], [0, 0, 1, 1], [], []>} : vector<8x32xf32>, vector<32x128xf32>, vector<8x128xf32> -> vector<8x128xf32>
    %398 = arith.addf %396, %397 : vector<8x128xf32>
    %399 = vector.extract_strided_slice %398 {offsets = [0, 0], sizes = [8, 32], strides = [1, 1]} : vector<8x128xf32> to vector<8x32xf32>
    %400 = arith.negf %399 : vector<8x32xf32>
    %401 = math.exp %400 : vector<8x32xf32>
    %cst_118 = arith.constant 1.000000e+00 : f32
    %402 = vector.broadcast %cst_118 : f32 to vector<8x32xf32>
    %403 = arith.addf %402, %401 : vector<8x32xf32>
    %404 = arith.divf %402, %403 : vector<8x32xf32>
    %405 = vector.extract_strided_slice %398 {offsets = [0, 32], sizes = [8, 32], strides = [1, 1]} : vector<8x128xf32> to vector<8x32xf32>
    %406 = arith.negf %405 : vector<8x32xf32>
    %407 = math.exp %406 : vector<8x32xf32>
    %cst_119 = arith.constant 1.000000e+00 : f32
    %408 = vector.broadcast %cst_119 : f32 to vector<8x32xf32>
    %409 = arith.addf %408, %407 : vector<8x32xf32>
    %410 = arith.divf %408, %409 : vector<8x32xf32>
    %411 = vector.extract_strided_slice %398 {offsets = [0, 64], sizes = [8, 32], strides = [1, 1]} : vector<8x128xf32> to vector<8x32xf32>
    %412 = math.tanh %411 : vector<8x32xf32>
    %413 = vector.extract_strided_slice %398 {offsets = [0, 96], sizes = [8, 32], strides = [1, 1]} : vector<8x128xf32> to vector<8x32xf32>
    %414 = arith.negf %413 : vector<8x32xf32>
    %415 = math.exp %414 : vector<8x32xf32>
    %cst_120 = arith.constant 1.000000e+00 : f32
    %416 = vector.broadcast %cst_120 : f32 to vector<8x32xf32>
    %417 = arith.addf %416, %415 : vector<8x32xf32>
    %418 = arith.divf %416, %417 : vector<8x32xf32>
    %419 = arith.mulf %410, %388 : vector<8x32xf32>
    %420 = arith.mulf %404, %412 : vector<8x32xf32>
    %421 = arith.addf %419, %420 : vector<8x32xf32>
    %422 = math.tanh %421 : vector<8x32xf32>
    %423 = arith.mulf %418, %422 : vector<8x32xf32>
    %424 = arith.index_cast %394 : i32 to index
    %c0_121 = arith.constant 0 : index
    %425 = vector.load %arg7[%424, %c0_121] : memref<64x32xf32, #tpu.memory_space<vmem>>, vector<8x32xf32>
    tpu.vector_store %arg7[%424, %c0_121], %423 {strides = array<i32>} : memref<64x32xf32, #tpu.memory_space<vmem>>, vector<8x32xf32>,
    %c4_i32_122 = arith.constant 4 : i32
    %c8_i32_123 = arith.constant 8 : i32
    %426 = arith.muli %c4_i32_122, %c8_i32_123 : i32
    %427 = tpu.assume_multiple %426, 8 : i32
    %428 = arith.index_cast %427 : i32 to index
    %c0_124 = arith.constant 0 : index
    %429 = vector.load %arg13[%428, %c0_124] : memref<64x128xf32, #tpu.memory_space<vmem>>, vector<8x128xf32>
    %cst_125 = arith.constant dense<0.000000e+00> : vector<8x128xf32>
    %430 = tpu.matmul %423, %289, %cst_125 {dimension_numbers = #tpu.dot_dimension_numbers<[1], [0], [0], [1], [0, 0, 1, 1], [], []>} : vector<8x32xf32>, vector<32x128xf32>, vector<8x128xf32> -> vector<8x128xf32>
    %431 = arith.addf %429, %430 : vector<8x128xf32>
    %432 = vector.extract_strided_slice %431 {offsets = [0, 0], sizes = [8, 32], strides = [1, 1]} : vector<8x128xf32> to vector<8x32xf32>
    %433 = arith.negf %432 : vector<8x32xf32>
    %434 = math.exp %433 : vector<8x32xf32>
    %cst_126 = arith.constant 1.000000e+00 : f32
    %435 = vector.broadcast %cst_126 : f32 to vector<8x32xf32>
    %436 = arith.addf %435, %434 : vector<8x32xf32>
    %437 = arith.divf %435, %436 : vector<8x32xf32>
    %438 = vector.extract_strided_slice %431 {offsets = [0, 32], sizes = [8, 32], strides = [1, 1]} : vector<8x128xf32> to vector<8x32xf32>
    %439 = arith.negf %438 : vector<8x32xf32>
    %440 = math.exp %439 : vector<8x32xf32>
    %cst_127 = arith.constant 1.000000e+00 : f32
    %441 = vector.broadcast %cst_127 : f32 to vector<8x32xf32>
    %442 = arith.addf %441, %440 : vector<8x32xf32>
    %443 = arith.divf %441, %442 : vector<8x32xf32>
    %444 = vector.extract_strided_slice %431 {offsets = [0, 64], sizes = [8, 32], strides = [1, 1]} : vector<8x128xf32> to vector<8x32xf32>
    %445 = math.tanh %444 : vector<8x32xf32>
    %446 = vector.extract_strided_slice %431 {offsets = [0, 96], sizes = [8, 32], strides = [1, 1]} : vector<8x128xf32> to vector<8x32xf32>
    %447 = arith.negf %446 : vector<8x32xf32>
    %448 = math.exp %447 : vector<8x32xf32>
    %cst_128 = arith.constant 1.000000e+00 : f32
    %449 = vector.broadcast %cst_128 : f32 to vector<8x32xf32>
    %450 = arith.addf %449, %448 : vector<8x32xf32>
    %451 = arith.divf %449, %450 : vector<8x32xf32>
    %452 = arith.mulf %443, %421 : vector<8x32xf32>
    %453 = arith.mulf %437, %445 : vector<8x32xf32>
    %454 = arith.addf %452, %453 : vector<8x32xf32>
    %455 = math.tanh %454 : vector<8x32xf32>
    %456 = arith.mulf %451, %455 : vector<8x32xf32>
    %457 = arith.index_cast %427 : i32 to index
    %c0_129 = arith.constant 0 : index
    %458 = vector.load %arg7[%457, %c0_129] : memref<64x32xf32, #tpu.memory_space<vmem>>, vector<8x32xf32>
    tpu.vector_store %arg7[%457, %c0_129], %456 {strides = array<i32>} : memref<64x32xf32, #tpu.memory_space<vmem>>, vector<8x32xf32>,
    %c5_i32_130 = arith.constant 5 : i32
    %c8_i32_131 = arith.constant 8 : i32
    %459 = arith.muli %c5_i32_130, %c8_i32_131 : i32
    %460 = tpu.assume_multiple %459, 8 : i32
    %461 = arith.index_cast %460 : i32 to index
    %c0_132 = arith.constant 0 : index
    %462 = vector.load %arg13[%461, %c0_132] : memref<64x128xf32, #tpu.memory_space<vmem>>, vector<8x128xf32>
    %cst_133 = arith.constant dense<0.000000e+00> : vector<8x128xf32>
    %463 = tpu.matmul %456, %289, %cst_133 {dimension_numbers = #tpu.dot_dimension_numbers<[1], [0], [0], [1], [0, 0, 1, 1], [], []>} : vector<8x32xf32>, vector<32x128xf32>, vector<8x128xf32> -> vector<8x128xf32>
    %464 = arith.addf %462, %463 : vector<8x128xf32>
    %465 = vector.extract_strided_slice %464 {offsets = [0, 0], sizes = [8, 32], strides = [1, 1]} : vector<8x128xf32> to vector<8x32xf32>
    %466 = arith.negf %465 : vector<8x32xf32>
    %467 = math.exp %466 : vector<8x32xf32>
    %cst_134 = arith.constant 1.000000e+00 : f32
    %468 = vector.broadcast %cst_134 : f32 to vector<8x32xf32>
    %469 = arith.addf %468, %467 : vector<8x32xf32>
    %470 = arith.divf %468, %469 : vector<8x32xf32>
    %471 = vector.extract_strided_slice %464 {offsets = [0, 32], sizes = [8, 32], strides = [1, 1]} : vector<8x128xf32> to vector<8x32xf32>
    %472 = arith.negf %471 : vector<8x32xf32>
    %473 = math.exp %472 : vector<8x32xf32>
    %cst_135 = arith.constant 1.000000e+00 : f32
    %474 = vector.broadcast %cst_135 : f32 to vector<8x32xf32>
    %475 = arith.addf %474, %473 : vector<8x32xf32>
    %476 = arith.divf %474, %475 : vector<8x32xf32>
    %477 = vector.extract_strided_slice %464 {offsets = [0, 64], sizes = [8, 32], strides = [1, 1]} : vector<8x128xf32> to vector<8x32xf32>
    %478 = math.tanh %477 : vector<8x32xf32>
    %479 = vector.extract_strided_slice %464 {offsets = [0, 96], sizes = [8, 32], strides = [1, 1]} : vector<8x128xf32> to vector<8x32xf32>
    %480 = arith.negf %479 : vector<8x32xf32>
    %481 = math.exp %480 : vector<8x32xf32>
    %cst_136 = arith.constant 1.000000e+00 : f32
    %482 = vector.broadcast %cst_136 : f32 to vector<8x32xf32>
    %483 = arith.addf %482, %481 : vector<8x32xf32>
    %484 = arith.divf %482, %483 : vector<8x32xf32>
    %485 = arith.mulf %476, %454 : vector<8x32xf32>
    %486 = arith.mulf %470, %478 : vector<8x32xf32>
    %487 = arith.addf %485, %486 : vector<8x32xf32>
    %488 = math.tanh %487 : vector<8x32xf32>
    %489 = arith.mulf %484, %488 : vector<8x32xf32>
    %490 = arith.index_cast %460 : i32 to index
    %c0_137 = arith.constant 0 : index
    %491 = vector.load %arg7[%490, %c0_137] : memref<64x32xf32, #tpu.memory_space<vmem>>, vector<8x32xf32>
    tpu.vector_store %arg7[%490, %c0_137], %489 {strides = array<i32>} : memref<64x32xf32, #tpu.memory_space<vmem>>, vector<8x32xf32>,
    %c6_i32_138 = arith.constant 6 : i32
    %c8_i32_139 = arith.constant 8 : i32
    %492 = arith.muli %c6_i32_138, %c8_i32_139 : i32
    %493 = tpu.assume_multiple %492, 8 : i32
    %494 = arith.index_cast %493 : i32 to index
    %c0_140 = arith.constant 0 : index
    %495 = vector.load %arg13[%494, %c0_140] : memref<64x128xf32, #tpu.memory_space<vmem>>, vector<8x128xf32>
    %cst_141 = arith.constant dense<0.000000e+00> : vector<8x128xf32>
    %496 = tpu.matmul %489, %289, %cst_141 {dimension_numbers = #tpu.dot_dimension_numbers<[1], [0], [0], [1], [0, 0, 1, 1], [], []>} : vector<8x32xf32>, vector<32x128xf32>, vector<8x128xf32> -> vector<8x128xf32>
    %497 = arith.addf %495, %496 : vector<8x128xf32>
    %498 = vector.extract_strided_slice %497 {offsets = [0, 0], sizes = [8, 32], strides = [1, 1]} : vector<8x128xf32> to vector<8x32xf32>
    %499 = arith.negf %498 : vector<8x32xf32>
    %500 = math.exp %499 : vector<8x32xf32>
    %cst_142 = arith.constant 1.000000e+00 : f32
    %501 = vector.broadcast %cst_142 : f32 to vector<8x32xf32>
    %502 = arith.addf %501, %500 : vector<8x32xf32>
    %503 = arith.divf %501, %502 : vector<8x32xf32>
    %504 = vector.extract_strided_slice %497 {offsets = [0, 32], sizes = [8, 32], strides = [1, 1]} : vector<8x128xf32> to vector<8x32xf32>
    %505 = arith.negf %504 : vector<8x32xf32>
    %506 = math.exp %505 : vector<8x32xf32>
    %cst_143 = arith.constant 1.000000e+00 : f32
    %507 = vector.broadcast %cst_143 : f32 to vector<8x32xf32>
    %508 = arith.addf %507, %506 : vector<8x32xf32>
    %509 = arith.divf %507, %508 : vector<8x32xf32>
    %510 = vector.extract_strided_slice %497 {offsets = [0, 64], sizes = [8, 32], strides = [1, 1]} : vector<8x128xf32> to vector<8x32xf32>
    %511 = math.tanh %510 : vector<8x32xf32>
    %512 = vector.extract_strided_slice %497 {offsets = [0, 96], sizes = [8, 32], strides = [1, 1]} : vector<8x128xf32> to vector<8x32xf32>
    %513 = arith.negf %512 : vector<8x32xf32>
    %514 = math.exp %513 : vector<8x32xf32>
    %cst_144 = arith.constant 1.000000e+00 : f32
    %515 = vector.broadcast %cst_144 : f32 to vector<8x32xf32>
    %516 = arith.addf %515, %514 : vector<8x32xf32>
    %517 = arith.divf %515, %516 : vector<8x32xf32>
    %518 = arith.mulf %509, %487 : vector<8x32xf32>
    %519 = arith.mulf %503, %511 : vector<8x32xf32>
    %520 = arith.addf %518, %519 : vector<8x32xf32>
    %521 = math.tanh %520 : vector<8x32xf32>
    %522 = arith.mulf %517, %521 : vector<8x32xf32>
    %523 = arith.index_cast %493 : i32 to index
    %c0_145 = arith.constant 0 : index
    %524 = vector.load %arg7[%523, %c0_145] : memref<64x32xf32, #tpu.memory_space<vmem>>, vector<8x32xf32>
    tpu.vector_store %arg7[%523, %c0_145], %522 {strides = array<i32>} : memref<64x32xf32, #tpu.memory_space<vmem>>, vector<8x32xf32>,
    %c7_i32_146 = arith.constant 7 : i32
    %c8_i32_147 = arith.constant 8 : i32
    %525 = arith.muli %c7_i32_146, %c8_i32_147 : i32
    %526 = tpu.assume_multiple %525, 8 : i32
    %527 = arith.index_cast %526 : i32 to index
    %c0_148 = arith.constant 0 : index
    %528 = vector.load %arg13[%527, %c0_148] : memref<64x128xf32, #tpu.memory_space<vmem>>, vector<8x128xf32>
    %cst_149 = arith.constant dense<0.000000e+00> : vector<8x128xf32>
    %529 = tpu.matmul %522, %289, %cst_149 {dimension_numbers = #tpu.dot_dimension_numbers<[1], [0], [0], [1], [0, 0, 1, 1], [], []>} : vector<8x32xf32>, vector<32x128xf32>, vector<8x128xf32> -> vector<8x128xf32>
    %530 = arith.addf %528, %529 : vector<8x128xf32>
    %531 = vector.extract_strided_slice %530 {offsets = [0, 0], sizes = [8, 32], strides = [1, 1]} : vector<8x128xf32> to vector<8x32xf32>
    %532 = arith.negf %531 : vector<8x32xf32>
    %533 = math.exp %532 : vector<8x32xf32>
    %cst_150 = arith.constant 1.000000e+00 : f32
    %534 = vector.broadcast %cst_150 : f32 to vector<8x32xf32>
    %535 = arith.addf %534, %533 : vector<8x32xf32>
    %536 = arith.divf %534, %535 : vector<8x32xf32>
    %537 = vector.extract_strided_slice %530 {offsets = [0, 32], sizes = [8, 32], strides = [1, 1]} : vector<8x128xf32> to vector<8x32xf32>
    %538 = arith.negf %537 : vector<8x32xf32>
    %539 = math.exp %538 : vector<8x32xf32>
    %cst_151 = arith.constant 1.000000e+00 : f32
    %540 = vector.broadcast %cst_151 : f32 to vector<8x32xf32>
    %541 = arith.addf %540, %539 : vector<8x32xf32>
    %542 = arith.divf %540, %541 : vector<8x32xf32>
    %543 = vector.extract_strided_slice %530 {offsets = [0, 64], sizes = [8, 32], strides = [1, 1]} : vector<8x128xf32> to vector<8x32xf32>
    %544 = math.tanh %543 : vector<8x32xf32>
    %545 = vector.extract_strided_slice %530 {offsets = [0, 96], sizes = [8, 32], strides = [1, 1]} : vector<8x128xf32> to vector<8x32xf32>
    %546 = arith.negf %545 : vector<8x32xf32>
    %547 = math.exp %546 : vector<8x32xf32>
    %cst_152 = arith.constant 1.000000e+00 : f32
    %548 = vector.broadcast %cst_152 : f32 to vector<8x32xf32>
    %549 = arith.addf %548, %547 : vector<8x32xf32>
    %550 = arith.divf %548, %549 : vector<8x32xf32>
    %551 = arith.mulf %542, %520 : vector<8x32xf32>
    %552 = arith.mulf %536, %544 : vector<8x32xf32>
    %553 = arith.addf %551, %552 : vector<8x32xf32>
    %554 = math.tanh %553 : vector<8x32xf32>
    %555 = arith.mulf %550, %554 : vector<8x32xf32>
    %556 = arith.index_cast %526 : i32 to index
    %c0_153 = arith.constant 0 : index
    %557 = vector.load %arg7[%556, %c0_153] : memref<64x32xf32, #tpu.memory_space<vmem>>, vector<8x32xf32>
    tpu.vector_store %arg7[%556, %c0_153], %555 {strides = array<i32>} : memref<64x32xf32, #tpu.memory_space<vmem>>, vector<8x32xf32>,
    %c8_i32_154 = arith.constant 8 : i32
    %c1_155 = arith.constant 1 : index
    %c0_156 = arith.constant 0 : index
    %c0_157 = arith.constant 0 : index
    %558 = vector.load %arg10[%c1_155, %c0_156, %c0_157] : memref<2x8x32xf32, #tpu.memory_space<vmem>>, vector<1x8x32xf32>
    %559 = vector.shape_cast %558 : vector<1x8x32xf32> to vector<8x32xf32>
    %560 = vector.shape_cast %555 : vector<8x32xf32> to vector<1x8x32xf32>
    tpu.vector_store %arg10[%c1_155, %c0_156, %c0_157], %560 {strides = array<i32>} : memref<2x8x32xf32, #tpu.memory_space<vmem>>, vector<1x8x32xf32>,
    %c1_158 = arith.constant 1 : index
    %c0_159 = arith.constant 0 : index
    %c0_160 = arith.constant 0 : index
    %561 = vector.load %arg11[%c1_158, %c0_159, %c0_160] : memref<2x8x32xf32, #tpu.memory_space<vmem>>, vector<1x8x32xf32>
    %562 = vector.shape_cast %561 : vector<1x8x32xf32> to vector<8x32xf32>
    %563 = vector.shape_cast %553 : vector<8x32xf32> to vector<1x8x32xf32>
    tpu.vector_store %arg11[%c1_158, %c0_159, %c0_160], %563 {strides = array<i32>} : memref<2x8x32xf32, #tpu.memory_space<vmem>>, vector<1x8x32xf32>,
    %c0_i32_161 = arith.constant 0 : i32
    %564 = arith.cmpi eq, %arg0, %c0_i32_161 : i32
    %565 = arith.extui %564 : i1 to i32
    %c0_i32_162 = arith.constant 0 : i32
    %566 = arith.cmpi ne, %565, %c0_i32_162 : i32
    scf.if %566 {
      %c0_163 = arith.constant 0 : index
      %c0_164 = arith.constant 0 : index
      %c0_165 = arith.constant 0 : index
      %567 = vector.load %arg10[%c0_163, %c0_164, %c0_165] : memref<2x8x32xf32, #tpu.memory_space<vmem>>, vector<2x8x32xf32>
      %c0_166 = arith.constant 0 : index
      %c0_167 = arith.constant 0 : index
      %c0_168 = arith.constant 0 : index
      %568 = vector.load %arg8[%c0_166, %c0_167, %c0_168] : memref<2x8x32xf32, #tpu.memory_space<vmem>>, vector<2x8x32xf32>
      tpu.vector_store %arg8[%c0_166, %c0_167, %c0_168], %567 {strides = array<i32>} : memref<2x8x32xf32, #tpu.memory_space<vmem>>, vector<2x8x32xf32>,
      %c0_169 = arith.constant 0 : index
      %c0_170 = arith.constant 0 : index
      %c0_171 = arith.constant 0 : index
      %569 = vector.load %arg11[%c0_169, %c0_170, %c0_171] : memref<2x8x32xf32, #tpu.memory_space<vmem>>, vector<2x8x32xf32>
      %c0_172 = arith.constant 0 : index
      %c0_173 = arith.constant 0 : index
      %c0_174 = arith.constant 0 : index
      %570 = vector.load %arg9[%c0_172, %c0_173, %c0_174] : memref<2x8x32xf32, #tpu.memory_space<vmem>>, vector<2x8x32xf32>
      tpu.vector_store %arg9[%c0_172, %c0_173, %c0_174], %569 {strides = array<i32>} : memref<2x8x32xf32, #tpu.memory_space<vmem>>, vector<2x8x32xf32>,
    } else {
    }
    return
  }
  func.func @transform_0(%arg0: i32) -> (i32, i32) {
    %c0_i32 = arith.constant 0 : i32
    %c0_i32_0 = arith.constant 0 : i32
    return %arg0, %c0_i32 : i32, i32
  }
  func.func @transform_1(%arg0: i32) -> (i32, i32, i32) {
    %c0_i32 = arith.constant 0 : i32
    %c0_i32_0 = arith.constant 0 : i32
    %c0_i32_1 = arith.constant 0 : i32
    %c0_i32_2 = arith.constant 0 : i32
    return %c0_i32, %c0_i32_0, %c0_i32_1 : i32, i32, i32
  }
  func.func @transform_2(%arg0: i32) -> (i32, i32, i32) {
    %c0_i32 = arith.constant 0 : i32
    %c0_i32_0 = arith.constant 0 : i32
    %c0_i32_1 = arith.constant 0 : i32
    %c0_i32_2 = arith.constant 0 : i32
    return %c0_i32, %c0_i32_0, %c0_i32_1 : i32, i32, i32
  }
  func.func @transform_3(%arg0: i32) -> (i32, i32, i32) {
    %c0_i32 = arith.constant 0 : i32
    %c0_i32_0 = arith.constant 0 : i32
    %c0_i32_1 = arith.constant 0 : i32
    %c0_i32_2 = arith.constant 0 : i32
    return %c0_i32, %c0_i32_0, %c0_i32_1 : i32, i32, i32
  }
  func.func @transform_4(%arg0: i32) -> (i32, i32, i32) {
    %c0_i32 = arith.constant 0 : i32
    %c0_i32_0 = arith.constant 0 : i32
    %c0_i32_1 = arith.constant 0 : i32
    %c0_i32_2 = arith.constant 0 : i32
    return %c0_i32, %c0_i32_0, %c0_i32_1 : i32, i32, i32
  }
  func.func @transform_5(%arg0: i32) -> (i32, i32, i32) {
    %c0_i32 = arith.constant 0 : i32
    %c0_i32_0 = arith.constant 0 : i32
    %c0_i32_1 = arith.constant 0 : i32
    %c0_i32_2 = arith.constant 0 : i32
    return %c0_i32, %c0_i32_0, %c0_i32_1 : i32, i32, i32
  }
  func.func @transform_6(%arg0: i32) -> (i32, i32) {
    %c0_i32 = arith.constant 0 : i32
    %c0_i32_0 = arith.constant 0 : i32
    return %arg0, %c0_i32 : i32, i32
  }
  func.func @transform_7(%arg0: i32) -> (i32, i32, i32) {
    %c0_i32 = arith.constant 0 : i32
    %c0_i32_0 = arith.constant 0 : i32
    %c0_i32_1 = arith.constant 0 : i32
    %c0_i32_2 = arith.constant 0 : i32
    return %c0_i32, %c0_i32_0, %c0_i32_1 : i32, i32, i32
  }
  func.func @transform_8(%arg0: i32) -> (i32, i32, i32) {
    %c0_i32 = arith.constant 0 : i32
    %c0_i32_0 = arith.constant 0 : i32
    %c0_i32_1 = arith.constant 0 : i32
    %c0_i32_2 = arith.constant 0 : i32
    return %c0_i32, %c0_i32_0, %c0_i32_1 : i32, i32, i32
  }
}

</mosaic_0001>

<llo_original>
// kernel: dec_lstm_cnn_forward.1
$region0: #{dec_lstm_cnn_forward.1}
  #allocation0 [shape = 'u32[]', space=smem, size = 0x4, offset = 0x4, fixed_abs, tag = 'smem constant byte address 0x4 - core index']
  #allocation1 [shape = 'u32[72,128]{1,0:T(1,128)}', space=vmem, size = 0x9000, scoped, tag = 'internal scratch']
  #allocation2 [shape = 'f32[2,8,32]{2,1,0:T(8,128)}', space=vmem, size = 0x2000, scoped, tag = 'scratch operand']
  #allocation3 [shape = 'f32[2,8,32]{2,1,0:T(8,128)}', space=vmem, size = 0x2000, scoped, tag = 'scratch operand']
  #allocation4 [shape = 'f32[64,32]{1,0:T(8,128)}', space=vmem, size = 0x8000, scoped, tag = 'scratch operand']
  #allocation5 [shape = 'f32[64,128]{1,0:T(8,128)}', space=vmem, size = 0x8000, scoped, tag = 'scratch operand']
  %s0 = inlined_call_operand.vmem [shape: f32[64,128], index: 0, kind: input, shape index: {}]
  %s1 = inlined_call_operand.vmem [shape: f32[2,32,128], index: 1, kind: input, shape index: {}]
  %s2 = inlined_call_operand.vmem [shape: f32[1,32,128], index: 2, kind: input, shape index: {}]
  %s3 = inlined_call_operand.vmem [shape: f32[1,1,128], index: 3, kind: input, shape index: {}]
  %s4 = inlined_call_operand.vmem [shape: f32[2,8,32], index: 4, kind: input, shape index: {}, may-alias: {4,5}]
  %s5 = inlined_call_operand.vmem [shape: f32[2,8,32], index: 5, kind: input, shape index: {}, may-alias: {4,5}]
  %s6 = inlined_call_operand.vmem [shape: f32[64,32], index: 6, kind: output, shape index: {0}]
  %s7 = inlined_call_operand.vmem [shape: f32[2,8,32], index: 7, kind: output, shape index: {1}]
  %s8 = inlined_call_operand.vmem [shape: f32[2,8,32], index: 8, kind: output, shape index: {2}]
  %9 = xla_tuple %s6, %s7, %s8
  %s10 = sld [smem:[#allocation0]]
  $region58: #{dec_lstm_cnn_forward.1} parent=0
    _
  %s12 = ssub.s32 1, %s10
  %s13 = scalar_select 0, %s12, %s10
  // Predicated region
  $region2: #{dec_lstm_cnn_forward.1} parent=0 // pred_check
    _
  $region3: #{dec_lstm_cnn_forward.1} parent=0 // pred_check_branch
    %15 = sbr.rel (0) target = $region5
  $region4: #{dec_lstm_cnn_forward.1} parent=0 // pred_region
    _
  $region5: #{dec_lstm_cnn_forward.1} parent=0 // pred_fallthru
    _
  // Predicated region
  $region6: #{dec_lstm_cnn_forward.1} parent=0 // pred_check
    _
  $region7: #{dec_lstm_cnn_forward.1} parent=0 // pred_check_branch
    %17 = sbr.rel (0) target = $region9
  $region8: #{dec_lstm_cnn_forward.1} parent=0 // pred_region
    _
  $region9: #{dec_lstm_cnn_forward.1} parent=0 // pred_fallthru
    _
  // Predicated region
  $region10: #{dec_lstm_cnn_forward.1} parent=0 // pred_check
    _
  $region11: #{dec_lstm_cnn_forward.1} parent=0 // pred_check_branch
    %19 = sbr.rel (0) target = $region13
  $region12: #{dec_lstm_cnn_forward.1} parent=0 // pred_region
    _
  $region13: #{dec_lstm_cnn_forward.1} parent=0 // pred_fallthru
    _
  // Predicated region
  $region14: #{dec_lstm_cnn_forward.1} parent=0 // pred_check
    _
  $region15: #{dec_lstm_cnn_forward.1} parent=0 // pred_check_branch
    %21 = sbr.rel (0) target = $region17
  $region16: #{dec_lstm_cnn_forward.1} parent=0 // pred_region
    _
  $region17: #{dec_lstm_cnn_forward.1} parent=0 // pred_fallthru
    _
  // Predicated region
  $region18: #{dec_lstm_cnn_forward.1} parent=0 // pred_check
    _
  $region19: #{dec_lstm_cnn_forward.1} parent=0 // pred_check_branch
    %23 = sbr.rel (0) target = $region21
  $region20: #{dec_lstm_cnn_forward.1} parent=0 // pred_region
    _
  $region21: #{dec_lstm_cnn_forward.1} parent=0 // pred_fallthru
    _
  // Predicated region
  $region22: #{dec_lstm_cnn_forward.1} parent=0 // pred_check
    _
  $region23: #{dec_lstm_cnn_forward.1} parent=0 // pred_check_branch
    %25 = sbr.rel (0) target = $region25
  $region24: #{dec_lstm_cnn_forward.1} parent=0 // pred_region
    _
  $region25: #{dec_lstm_cnn_forward.1} parent=0 // pred_fallthru
    _
  %p26 = scmp.eq.s32.totalorder 0, 0
  // Predicated region
  $region26: #{dec_lstm_cnn_forward.1} parent=0 // pred_check
    %p27 = pneg %p26
  $region27: #{dec_lstm_cnn_forward.1} parent=0 // pred_check_branch
    %29 = sbr.rel (%p27) target = $region29
  $region28: #{dec_lstm_cnn_forward.1} parent=0 // pred_region
    %v30 = vld [vmem:[%s4] sm:$0xff]
    %v31 = vld [vmem:[%s4 + $0x8] sm:$0xff]
    %vm32 = vcmask 261120
    %33 = vst.msk [vmem:[#allocation2] sm:$0xff] %vm32, %v30
    %34 = vst.msk [vmem:[#allocation2 + $0x8] sm:$0xff] %vm32, %v31
    %v35 = vld [vmem:[%s5] sm:$0xff]
    %v36 = vld [vmem:[%s5 + $0x8] sm:$0xff]
    %37 = vst.msk [vmem:[#allocation3] sm:$0xff] %vm32, %v35
    %38 = vst.msk [vmem:[#allocation3 + $0x8] sm:$0xff] %vm32, %v36
  $region29: #{dec_lstm_cnn_forward.1} parent=0 // pred_fallthru
    _
  %v39 = vld [vmem:[%s1] sm:$0xff]
  %v40 = vld [vmem:[%s1 + $0x8] sm:$0xff]
  %v41 = vld [vmem:[%s1 + $0x10] sm:$0xff]
  %v42 = vld [vmem:[%s1 + $0x18] sm:$0xff]
  %v43 = vld [vmem:[#allocation2] sm:$0xff]
  %v44 = vld [vmem:[#allocation3] sm:$0xff]
  %v45 = vld [vmem:[%s0] sm:$0xff]
  %vm46 = vcmask 261120
  %v48 = vsel %vm46, %v43, 0
  %50 = vmatpush.msra.mxu0 0.0
  %51 = vmatpush.msra.mxu0 0.0
  %52 = vmatpush.msra.mxu0 0.0
  %53 = vmatpush.msra.mxu0 0.0
  %54 = vmatpush.msra.mxu0 0.0
  %55 = vmatpush.msra.mxu0 0.0
  %56 = vmatpush.msra.mxu0 0.0
  %57 = vmatpush.msra.mxu0 0.0
  %58 = vmatpush.msra.mxu0 0.0
  %59 = vmatpush.msra.mxu0 0.0
  %60 = vmatpush.msra.mxu0 0.0
  %61 = vmatpush.msra.mxu0 0.0
  %62 = vmatpush.msra.mxu0 %v42
  %63 = vmatpush.msra.mxu0 %v41
  %64 = vmatpush.msra.mxu0 %v40
  %65 = vmatpush.msra.mxu0 %v39
  %66 = vmatmul.f32.gmra.mxu0 %v48
  %v67 = vpop.f32.mrf.mxu0
  %v68 = vadd.f32 0.0, %v67
  %69 = vdwg.mxu0
  %v70 = vadd.f32 %v45, %v68
  %v71 = vxor.u32 %v70, 2147483648
  %v72 = vmul.f32 %v71, 1.442695
  %v73 = vpow.pop %v72
  %v74 = vadd.f32 %v73, 1.0
  %v75 = vrcp.pop %v74
  %v76 = vmul.f32 %v74, %v75
  %v77 = vsub.f32 1.0, %v76
  %v78 = vmul.f32 %v75, %v77
  %v79 = vadd.f32 %v75, %v78
  %vm80 = vweird.f32 %v74
  %vm81 = vweird.f32 %v75
  %vm82 = vmor %vm80, %vm81
  %v83 = vsel %vm82, %v75, %v79
  %v84 = vand.u32 2147483647, %v74
  %vm85 = vcmp.eq.f32.partialorder %v84, 8.507059e+37
  %v86 = vand.u32 %v74, 2147483648
  %v87 = vor.u32 1.1754944e-38, %v86
  %v88 = vsel %vm85, %v87, %v83
  %v89 = vmul.f32 1.0, %v88
  %v90 = vtanh.pop %v70
  %92 = vrot.lane.b32.xlu0 %v44, 32
  %v93 = vpop.permute.xlu0 %92
  %v95 = vmul.f32 %v89, %v93
  %97 = vrot.lane.b32.xlu0 %v90, 64
  %v98 = vpop.permute.xlu0 %97
  %v100 = vmul.f32 %v89, %v98
  %102 = vrot.lane.b32.xlu0 %v100, 32
  %v103 = vpop.permute.xlu0 %102
  %v105 = vadd.f32 %v95, %v103
  %v106 = vtanh.pop %v105
  %108 = vrot.lane.b32.xlu0 %v106, 64
  %v109 = vpop.permute.xlu0 %108
  %v111 = vmul.f32 %v89, %v109
  %113 = vrot.lane.b32.xlu0 %v111, 32
  %v114 = vpop.permute.xlu0 %113
  %116 = vst.msk [vmem:[#allocation4] sm:$0xff] %vm46, %v114
  %s117 = scalar_lea.vmem %s0, 8
  %v118 = vld [vmem:[%s117] sm:$0xff]
  %v119 = vsel %vm46, %v114, 0
  %121 = vmatpush.msra.mxu0 0.0
  %122 = vmatpush.msra.mxu0 0.0
  %123 = vmatpush.msra.mxu0 0.0
  %124 = vmatpush.msra.mxu0 0.0
  %125 = vmatpush.msra.mxu0 0.0
  %126 = vmatpush.msra.mxu0 0.0
  %127 = vmatpush.msra.mxu0 0.0
  %128 = vmatpush.msra.mxu0 0.0
  %129 = vmatpush.msra.mxu0 0.0
  %130 = vmatpush.msra.mxu0 0.0
  %131 = vmatpush.msra.mxu0 0.0
  %132 = vmatpush.msra.mxu0 0.0
  %133 = vmatpush.msra.mxu0 %v42
  %134 = vmatpush.msra.mxu0 %v41
  %135 = vmatpush.msra.mxu0 %v40
  %136 = vmatpush.msra.mxu0 %v39
  %137 = vmatmul.f32.gmra.mxu0 %v119
  %v138 = vpop.f32.mrf.mxu0
  %v139 = vadd.f32 0.0, %v138
  %140 = vdwg.mxu0
  %v141 = vadd.f32 %v118, %v139
  %v142 = vxor.u32 %v141, 2147483648
  %v143 = vmul.f32 %v142, 1.442695
  %v144 = vpow.pop %v143
  %v145 = vadd.f32 %v144, 1.0
  %v146 = vrcp.pop %v145
  %v147 = vmul.f32 %v145, %v146
  %v148 = vsub.f32 1.0, %v147
  %v149 = vmul.f32 %v146, %v148
  %v150 = vadd.f32 %v146, %v149
  %vm151 = vweird.f32 %v145
  %vm152 = vweird.f32 %v146
  %vm153 = vmor %vm151, %vm152
  %v154 = vsel %vm153, %v146, %v150
  %v155 = vand.u32 2147483647, %v145
  %vm156 = vcmp.eq.f32.partialorder %v155, 8.507059e+37
  %v157 = vand.u32 %v145, 2147483648
  %v158 = vor.u32 1.1754944e-38, %v157
  %v159 = vsel %vm156, %v158, %v154
  %v160 = vmul.f32 1.0, %v159
  %v161 = vtanh.pop %v141
  %v162 = vmul.f32 %v160, %v105
  %164 = vrot.lane.b32.xlu0 %v161, 64
  %v165 = vpop.permute.xlu0 %164
  %v167 = vmul.f32 %v160, %v165
  %169 = vrot.lane.b32.xlu0 %v167, 32
  %v170 = vpop.permute.xlu0 %169
  %v172 = vadd.f32 %v162, %v170
  %v173 = vtanh.pop %v172
  %175 = vrot.lane.b32.xlu0 %v173, 64
  %v176 = vpop.permute.xlu0 %175
  %v178 = vmul.f32 %v160, %v176
  %180 = vrot.lane.b32.xlu0 %v178, 32
  %v181 = vpop.permute.xlu0 %180
  %s183 = scalar_lea.vmem [#allocation4], 8
  %184 = vst.msk [vmem:[%s183] sm:$0xff] %vm46, %v181
  %s185 = scalar_lea.vmem %s0, 16
  %v186 = vld [vmem:[%s185] sm:$0xff]
  %v187 = vsel %vm46, %v181, 0
  %189 = vmatpush.msra.mxu0 0.0
  %190 = vmatpush.msra.mxu0 0.0
  %191 = vmatpush.msra.mxu0 0.0
  %192 = vmatpush.msra.mxu0 0.0
  %193 = vmatpush.msra.mxu0 0.0
  %194 = vmatpush.msra.mxu0 0.0
  %195 = vmatpush.msra.mxu0 0.0
  %196 = vmatpush.msra.mxu0 0.0
  %197 = vmatpush.msra.mxu0 0.0
  %198 = vmatpush.msra.mxu0 0.0
  %199 = vmatpush.msra.mxu0 0.0
  %200 = vmatpush.msra.mxu0 0.0
  %201 = vmatpush.msra.mxu0 %v42
  %202 = vmatpush.msra.mxu0 %v41
  %203 = vmatpush.msra.mxu0 %v40
  %204 = vmatpush.msra.mxu0 %v39
  %205 = vmatmul.f32.gmra.mxu0 %v187
  %v206 = vpop.f32.mrf.mxu0
  %v207 = vadd.f32 0.0, %v206
  %208 = vdwg.mxu0
  %v209 = vadd.f32 %v186, %v207
  %v210 = vxor.u32 %v209, 2147483648
  %v211 = vmul.f32 %v210, 1.442695
  %v212 = vpow.pop %v211
  %v213 = vadd.f32 %v212, 1.0
  %v214 = vrcp.pop %v213
  %v215 = vmul.f32 %v213, %v214
  %v216 = vsub.f32 1.0, %v215
  %v217 = vmul.f32 %v214, %v216
  %v218 = vadd.f32 %v214, %v217
  %vm219 = vweird.f32 %v213
  %vm220 = vweird.f32 %v214
  %vm221 = vmor %vm219, %vm220
  %v222 = vsel %vm221, %v214, %v218
  %v223 = vand.u32 2147483647, %v213
  %vm224 = vcmp.eq.f32.partialorder %v223, 8.507059e+37
  %v225 = vand.u32 %v213, 2147483648
  %v226 = vor.u32 1.1754944e-38, %v225
  %v227 = vsel %vm224, %v226, %v222
  %v228 = vmul.f32 1.0, %v227
  %v229 = vtanh.pop %v209
  %v230 = vmul.f32 %v228, %v172
  %232 = vrot.lane.b32.xlu0 %v229, 64
  %v233 = vpop.permute.xlu0 %232
  %v235 = vmul.f32 %v228, %v233
  %237 = vrot.lane.b32.xlu0 %v235, 32
  %v238 = vpop.permute.xlu0 %237
  %v240 = vadd.f32 %v230, %v238
  %v241 = vtanh.pop %v240
  %243 = vrot.lane.b32.xlu0 %v241, 64
  %v244 = vpop.permute.xlu0 %243
  %v246 = vmul.f32 %v228, %v244
  %248 = vrot.lane.b32.xlu0 %v246, 32
  %v249 = vpop.permute.xlu0 %248
  %s251 = scalar_lea.vmem [#allocation4], 16
  %252 = vst.msk [vmem:[%s251] sm:$0xff] %vm46, %v249
  %s253 = scalar_lea.vmem %s0, 24
  %v254 = vld [vmem:[%s253] sm:$0xff]
  %v255 = vsel %vm46, %v249, 0
  %257 = vmatpush.msra.mxu0 0.0
  %258 = vmatpush.msra.mxu0 0.0
  %259 = vmatpush.msra.mxu0 0.0
  %260 = vmatpush.msra.mxu0 0.0
  %261 = vmatpush.msra.mxu0 0.0
  %262 = vmatpush.msra.mxu0 0.0
  %263 = vmatpush.msra.mxu0 0.0
  %264 = vmatpush.msra.mxu0 0.0
  %265 = vmatpush.msra.mxu0 0.0
  %266 = vmatpush.msra.mxu0 0.0
  %267 = vmatpush.msra.mxu0 0.0
  %268 = vmatpush.msra.mxu0 0.0
  %269 = vmatpush.msra.mxu0 %v42
  %270 = vmatpush.msra.mxu0 %v41
  %271 = vmatpush.msra.mxu0 %v40
  %272 = vmatpush.msra.mxu0 %v39
  %273 = vmatmul.f32.gmra.mxu0 %v255
  %v274 = vpop.f32.mrf.mxu0
  %v275 = vadd.f32 0.0, %v274
  %276 = vdwg.mxu0
  %v277 = vadd.f32 %v254, %v275
  %v278 = vxor.u32 %v277, 2147483648
  %v279 = vmul.f32 %v278, 1.442695
  %v280 = vpow.pop %v279
  %v281 = vadd.f32 %v280, 1.0
  %v282 = vrcp.pop %v281
  %v283 = vmul.f32 %v281, %v282
  %v284 = vsub.f32 1.0, %v283
  %v285 = vmul.f32 %v282, %v284
  %v286 = vadd.f32 %v282, %v285
  %vm287 = vweird.f32 %v281
  %vm288 = vweird.f32 %v282
  %vm289 = vmor %vm287, %vm288
  %v290 = vsel %vm289, %v282, %v286
  %v291 = vand.u32 2147483647, %v281
  %vm292 = vcmp.eq.f32.partialorder %v291, 8.507059e+37
  %v293 = vand.u32 %v281, 2147483648
  %v294 = vor.u32 1.1754944e-38, %v293
  %v295 = vsel %vm292, %v294, %v290
  %v296 = vmul.f32 1.0, %v295
  %v297 = vtanh.pop %v277
  %v298 = vmul.f32 %v296, %v240
  %300 = vrot.lane.b32.xlu0 %v297, 64
  %v301 = vpop.permute.xlu0 %300
  %v303 = vmul.f32 %v296, %v301
  %305 = vrot.lane.b32.xlu0 %v303, 32
  %v306 = vpop.permute.xlu0 %305
  %v308 = vadd.f32 %v298, %v306
  %v309 = vtanh.pop %v308
  %311 = vrot.lane.b32.xlu0 %v309, 64
  %v312 = vpop.permute.xlu0 %311
  %v314 = vmul.f32 %v296, %v312
  %316 = vrot.lane.b32.xlu0 %v314, 32
  %v317 = vpop.permute.xlu0 %316
  %s319 = scalar_lea.vmem [#allocation4], 24
  %320 = vst.msk [vmem:[%s319] sm:$0xff] %vm46, %v317
  %s321 = scalar_lea.vmem %s0, 32
  %v322 = vld [vmem:[%s321] sm:$0xff]
  %v323 = vsel %vm46, %v317, 0
  %325 = vmatpush.msra.mxu0 0.0
  %326 = vmatpush.msra.mxu0 0.0
  %327 = vmatpush.msra.mxu0 0.0
  %328 = vmatpush.msra.mxu0 0.0
  %329 = vmatpush.msra.mxu0 0.0
  %330 = vmatpush.msra.mxu0 0.0
  %331 = vmatpush.msra.mxu0 0.0
  %332 = vmatpush.msra.mxu0 0.0
  %333 = vmatpush.msra.mxu0 0.0
  %334 = vmatpush.msra.mxu0 0.0
  %335 = vmatpush.msra.mxu0 0.0
  %336 = vmatpush.msra.mxu0 0.0
  %337 = vmatpush.msra.mxu0 %v42
  %338 = vmatpush.msra.mxu0 %v41
  %339 = vmatpush.msra.mxu0 %v40
  %340 = vmatpush.msra.mxu0 %v39
  %341 = vmatmul.f32.gmra.mxu0 %v323
  %v342 = vpop.f32.mrf.mxu0
  %v343 = vadd.f32 0.0, %v342
  %344 = vdwg.mxu0
  %v345 = vadd.f32 %v322, %v343
  %v346 = vxor.u32 %v345, 2147483648
  %v347 = vmul.f32 %v346, 1.442695
  %v348 = vpow.pop %v347
  %v349 = vadd.f32 %v348, 1.0
  %v350 = vrcp.pop %v349
  %v351 = vmul.f32 %v349, %v350
  %v352 = vsub.f32 1.0, %v351
  %v353 = vmul.f32 %v350, %v352
  %v354 = vadd.f32 %v350, %v353
  %vm355 = vweird.f32 %v349
  %vm356 = vweird.f32 %v350
  %vm357 = vmor %vm355, %vm356
  %v358 = vsel %vm357, %v350, %v354
  %v359 = vand.u32 2147483647, %v349
  %vm360 = vcmp.eq.f32.partialorder %v359, 8.507059e+37
  %v361 = vand.u32 %v349, 2147483648
  %v362 = vor.u32 1.1754944e-38, %v361
  %v363 = vsel %vm360, %v362, %v358
  %v364 = vmul.f32 1.0, %v363
  %v365 = vtanh.pop %v345
  %v366 = vmul.f32 %v364, %v308
  %368 = vrot.lane.b32.xlu0 %v365, 64
  %v369 = vpop.permute.xlu0 %368
  %v371 = vmul.f32 %v364, %v369
  %373 = vrot.lane.b32.xlu0 %v371, 32
  %v374 = vpop.permute.xlu0 %373
  %v376 = vadd.f32 %v366, %v374
  %v377 = vtanh.pop %v376
  %379 = vrot.lane.b32.xlu0 %v377, 64
  %v380 = vpop.permute.xlu0 %379
  %v382 = vmul.f32 %v364, %v380
  %384 = vrot.lane.b32.xlu0 %v382, 32
  %v385 = vpop.permute.xlu0 %384
  %s387 = scalar_lea.vmem [#allocation4], 32
  %388 = vst.msk [vmem:[%s387] sm:$0xff] %vm46, %v385
  %s389 = scalar_lea.vmem %s0, 40
  %v390 = vld [vmem:[%s389] sm:$0xff]
  %v391 = vsel %vm46, %v385, 0
  %393 = vmatpush.msra.mxu0 0.0
  %394 = vmatpush.msra.mxu0 0.0
  %395 = vmatpush.msra.mxu0 0.0
  %396 = vmatpush.msra.mxu0 0.0
  %397 = vmatpush.msra.mxu0 0.0
  %398 = vmatpush.msra.mxu0 0.0
  %399 = vmatpush.msra.mxu0 0.0
  %400 = vmatpush.msra.mxu0 0.0
  %401 = vmatpush.msra.mxu0 0.0
  %402 = vmatpush.msra.mxu0 0.0
  %403 = vmatpush.msra.mxu0 0.0
  %404 = vmatpush.msra.mxu0 0.0
  %405 = vmatpush.msra.mxu0 %v42
  %406 = vmatpush.msra.mxu0 %v41
  %407 = vmatpush.msra.mxu0 %v40
  %408 = vmatpush.msra.mxu0 %v39
  %409 = vmatmul.f32.gmra.mxu0 %v391
  %v410 = vpop.f32.mrf.mxu0
  %v411 = vadd.f32 0.0, %v410
  %412 = vdwg.mxu0
  %v413 = vadd.f32 %v390, %v411
  %v414 = vxor.u32 %v413, 2147483648
  %v415 = vmul.f32 %v414, 1.442695
  %v416 = vpow.pop %v415
  %v417 = vadd.f32 %v416, 1.0
  %v418 = vrcp.pop %v417
  %v419 = vmul.f32 %v417, %v418
  %v420 = vsub.f32 1.0, %v419
  %v421 = vmul.f32 %v418, %v420
  %v422 = vadd.f32 %v418, %v421
  %vm423 = vweird.f32 %v417
  %vm424 = vweird.f32 %v418
  %vm425 = vmor %vm423, %vm424
  %v426 = vsel %vm425, %v418, %v422
  %v427 = vand.u32 2147483647, %v417
  %vm428 = vcmp.eq.f32.partialorder %v427, 8.507059e+37
  %v429 = vand.u32 %v417, 2147483648
  %v430 = vor.u32 1.1754944e-38, %v429
  %v431 = vsel %vm428, %v430, %v426
  %v432 = vmul.f32 1.0, %v431
  %v433 = vtanh.pop %v413
  %v434 = vmul.f32 %v432, %v376
  %436 = vrot.lane.b32.xlu0 %v433, 64
  %v437 = vpop.permute.xlu0 %436
  %v439 = vmul.f32 %v432, %v437
  %441 = vrot.lane.b32.xlu0 %v439, 32
  %v442 = vpop.permute.xlu0 %441
  %v444 = vadd.f32 %v434, %v442
  %v445 = vtanh.pop %v444
  %447 = vrot.lane.b32.xlu0 %v445, 64
  %v448 = vpop.permute.xlu0 %447
  %v450 = vmul.f32 %v432, %v448
  %452 = vrot.lane.b32.xlu0 %v450, 32
  %v453 = vpop.permute.xlu0 %452
  %s455 = scalar_lea.vmem [#allocation4], 40
  %456 = vst.msk [vmem:[%s455] sm:$0xff] %vm46, %v453
  %s457 = scalar_lea.vmem %s0, 48
  %v458 = vld [vmem:[%s457] sm:$0xff]
  %v459 = vsel %vm46, %v453, 0
  %461 = vmatpush.msra.mxu0 0.0
  %462 = vmatpush.msra.mxu0 0.0
  %463 = vmatpush.msra.mxu0 0.0
  %464 = vmatpush.msra.mxu0 0.0
  %465 = vmatpush.msra.mxu0 0.0
  %466 = vmatpush.msra.mxu0 0.0
  %467 = vmatpush.msra.mxu0 0.0
  %468 = vmatpush.msra.mxu0 0.0
  %469 = vmatpush.msra.mxu0 0.0
  %470 = vmatpush.msra.mxu0 0.0
  %471 = vmatpush.msra.mxu0 0.0
  %472 = vmatpush.msra.mxu0 0.0
  %473 = vmatpush.msra.mxu0 %v42
  %474 = vmatpush.msra.mxu0 %v41
  %475 = vmatpush.msra.mxu0 %v40
  %476 = vmatpush.msra.mxu0 %v39
  %477 = vmatmul.f32.gmra.mxu0 %v459
  %v478 = vpop.f32.mrf.mxu0
  %v479 = vadd.f32 0.0, %v478
  %480 = vdwg.mxu0
  %v481 = vadd.f32 %v458, %v479
  %v482 = vxor.u32 %v481, 2147483648
  %v483 = vmul.f32 %v482, 1.442695
  %v484 = vpow.pop %v483
  %v485 = vadd.f32 %v484, 1.0
  %v486 = vrcp.pop %v485
  %v487 = vmul.f32 %v485, %v486
  %v488 = vsub.f32 1.0, %v487
  %v489 = vmul.f32 %v486, %v488
  %v490 = vadd.f32 %v486, %v489
  %vm491 = vweird.f32 %v485
  %vm492 = vweird.f32 %v486
  %vm493 = vmor %vm491, %vm492
  %v494 = vsel %vm493, %v486, %v490
  %v495 = vand.u32 2147483647, %v485
  %vm496 = vcmp.eq.f32.partialorder %v495, 8.507059e+37
  %v497 = vand.u32 %v485, 2147483648
  %v498 = vor.u32 1.1754944e-38, %v497
  %v499 = vsel %vm496, %v498, %v494
  %v500 = vmul.f32 1.0, %v499
  %v501 = vtanh.pop %v481
  %v502 = vmul.f32 %v500, %v444
  %504 = vrot.lane.b32.xlu0 %v501, 64
  %v505 = vpop.permute.xlu0 %504
  %v507 = vmul.f32 %v500, %v505
  %509 = vrot.lane.b32.xlu0 %v507, 32
  %v510 = vpop.permute.xlu0 %509
  %v512 = vadd.f32 %v502, %v510
  %v513 = vtanh.pop %v512
  %515 = vrot.lane.b32.xlu0 %v513, 64
  %v516 = vpop.permute.xlu0 %515
  %v518 = vmul.f32 %v500, %v516
  %520 = vrot.lane.b32.xlu0 %v518, 32
  %v521 = vpop.permute.xlu0 %520
  %s523 = scalar_lea.vmem [#allocation4], 48
  %524 = vst.msk [vmem:[%s523] sm:$0xff] %vm46, %v521
  %s525 = scalar_lea.vmem %s0, 56
  %v526 = vld [vmem:[%s525] sm:$0xff]
  %v527 = vsel %vm46, %v521, 0
  %529 = vmatpush.msra.mxu0 0.0
  %530 = vmatpush.msra.mxu0 0.0
  %531 = vmatpush.msra.mxu0 0.0
  %532 = vmatpush.msra.mxu0 0.0
  %533 = vmatpush.msra.mxu0 0.0
  %534 = vmatpush.msra.mxu0 0.0
  %535 = vmatpush.msra.mxu0 0.0
  %536 = vmatpush.msra.mxu0 0.0
  %537 = vmatpush.msra.mxu0 0.0
  %538 = vmatpush.msra.mxu0 0.0
  %539 = vmatpush.msra.mxu0 0.0
  %540 = vmatpush.msra.mxu0 0.0
  %541 = vmatpush.msra.mxu0 %v42
  %542 = vmatpush.msra.mxu0 %v41
  %543 = vmatpush.msra.mxu0 %v40
  %544 = vmatpush.msra.mxu0 %v39
  %545 = vmatmul.f32.gmra.mxu0 %v527
  %v546 = vpop.f32.mrf.mxu0
  %v547 = vadd.f32 0.0, %v546
  %548 = vdwg.mxu0
  %v549 = vadd.f32 %v526, %v547
  %v550 = vxor.u32 %v549, 2147483648
  %v551 = vmul.f32 %v550, 1.442695
  %v552 = vpow.pop %v551
  %v553 = vadd.f32 %v552, 1.0
  %v554 = vrcp.pop %v553
  %v555 = vmul.f32 %v553, %v554
  %v556 = vsub.f32 1.0, %v555
  %v557 = vmul.f32 %v554, %v556
  %v558 = vadd.f32 %v554, %v557
  %vm559 = vweird.f32 %v553
  %vm560 = vweird.f32 %v554
  %vm561 = vmor %vm559, %vm560
  %v562 = vsel %vm561, %v554, %v558
  %v563 = vand.u32 2147483647, %v553
  %vm564 = vcmp.eq.f32.partialorder %v563, 8.507059e+37
  %v565 = vand.u32 %v553, 2147483648
  %v566 = vor.u32 1.1754944e-38, %v565
  %v567 = vsel %vm564, %v566, %v562
  %v568 = vmul.f32 1.0, %v567
  %v569 = vtanh.pop %v549
  %v570 = vmul.f32 %v568, %v512
  %572 = vrot.lane.b32.xlu0 %v569, 64
  %v573 = vpop.permute.xlu0 %572
  %v575 = vmul.f32 %v568, %v573
  %577 = vrot.lane.b32.xlu0 %v575, 32
  %v578 = vpop.permute.xlu0 %577
  %v580 = vadd.f32 %v570, %v578
  %v581 = vtanh.pop %v580
  %583 = vrot.lane.b32.xlu0 %v581, 64
  %v584 = vpop.permute.xlu0 %583
  %v586 = vmul.f32 %v568, %v584
  %588 = vrot.lane.b32.xlu0 %v586, 32
  %v589 = vpop.permute.xlu0 %588
  %s591 = scalar_lea.vmem [#allocation4], 56
  %592 = vst.msk [vmem:[%s591] sm:$0xff] %vm46, %v589
  %593 = vst.msk [vmem:[#allocation2] sm:$0xff] %vm46, %v589
  %595 = vrot.lane.b32.xlu0 %v580, 96
  %v596 = vpop.permute.xlu0 %595
  %598 = vst.msk [vmem:[#allocation3] sm:$0xff] %vm46, %v596
  %v599 = vld [vmem:[#allocation4] sm:$0xff]
  %v600 = vld [vmem:[#allocation4 + $0x8] sm:$0xff]
  %v601 = vld [vmem:[#allocation4 + $0x10] sm:$0xff]
  %v602 = vld [vmem:[#allocation4 + $0x18] sm:$0xff]
  %v603 = vld [vmem:[#allocation4 + $0x20] sm:$0xff]
  %v604 = vld [vmem:[#allocation4 + $0x28] sm:$0xff]
  %v605 = vld [vmem:[#allocation4 + $0x30] sm:$0xff]
  %v606 = vld [vmem:[#allocation4 + $0x38] sm:$0xff]
  %v607 = vld [vmem:[%s2] sm:$0xff]
  %v608 = vld [vmem:[%s2 + $0x8] sm:$0xff]
  %v609 = vld [vmem:[%s2 + $0x10] sm:$0xff]
  %v610 = vld [vmem:[%s2 + $0x18] sm:$0xff]
  %v611 = vld [vmem:[%s3] sm:$0x1]
  %v613 = vperm.slane %v611, 0
  %v616 = vsel %vm46, %v599, 0
  %v619 = vsel %vm46, %v600, 0
  %v622 = vsel %vm46, %v601, 0
  %v625 = vsel %vm46, %v602, 0
  %v628 = vsel %vm46, %v603, 0
  %v631 = vsel %vm46, %v604, 0
  %v634 = vsel %vm46, %v605, 0
  %v637 = vsel %vm46, %v606, 0
  %639 = vmatpush.msra.mxu0 0.0
  %640 = vmatpush.msra.mxu0 0.0
  %641 = vmatpush.msra.mxu0 0.0
  %642 = vmatpush.msra.mxu0 0.0
  %643 = vmatpush.msra.mxu0 0.0
  %644 = vmatpush.msra.mxu0 0.0
  %645 = vmatpush.msra.mxu0 0.0
  %646 = vmatpush.msra.mxu0 0.0
  %647 = vmatpush.msra.mxu0 0.0
  %648 = vmatpush.msra.mxu0 0.0
  %649 = vmatpush.msra.mxu0 0.0
  %650 = vmatpush.msra.mxu0 0.0
  %651 = vmatpush.msra.mxu0 %v610
  %652 = vmatpush.msra.mxu0 %v609
  %653 = vmatpush.msra.mxu0 %v608
  %654 = vmatpush.msra.mxu0 %v607
  %655 = vmatmul.f32.gmra.mxu0 %v616
  %v656 = vpop.f32.mrf.mxu0
  %v657 = vadd.f32 %v613, %v656
  %658 = vmatmul.f32.gmra.mxu0 %v619
  %v659 = vpop.f32.mrf.mxu0
  %v660 = vadd.f32 %v613, %v659
  %661 = vmatmul.f32.gmra.mxu0 %v622
  %v662 = vpop.f32.mrf.mxu0
  %v663 = vadd.f32 %v613, %v662
  %664 = vmatmul.f32.gmra.mxu0 %v625
  %v665 = vpop.f32.mrf.mxu0
  %v666 = vadd.f32 %v613, %v665
  %667 = vmatmul.f32.gmra.mxu0 %v628
  %v668 = vpop.f32.mrf.mxu0
  %v669 = vadd.f32 %v613, %v668
  %670 = vmatmul.f32.gmra.mxu0 %v631
  %v671 = vpop.f32.mrf.mxu0
  %v672 = vadd.f32 %v613, %v671
  %673 = vmatmul.f32.gmra.mxu0 %v634
  %v674 = vpop.f32.mrf.mxu0
  %v675 = vadd.f32 %v613, %v674
  %676 = vmatmul.f32.gmra.mxu0 %v637
  %v677 = vpop.f32.mrf.mxu0
  %v678 = vadd.f32 %v613, %v677
  %679 = vdwg.mxu0
  %680 = vst [vmem:[#allocation5] sm:$0xff] %v657
  %681 = vst [vmem:[#allocation5 + $0x8] sm:$0xff] %v660
  %682 = vst [vmem:[#allocation5 + $0x10] sm:$0xff] %v663
  %683 = vst [vmem:[#allocation5 + $0x18] sm:$0xff] %v666
  %684 = vst [vmem:[#allocation5 + $0x20] sm:$0xff] %v669
  %685 = vst [vmem:[#allocation5 + $0x28] sm:$0xff] %v672
  %686 = vst [vmem:[#allocation5 + $0x30] sm:$0xff] %v675
  %687 = vst [vmem:[#allocation5 + $0x38] sm:$0xff] %v678
  %s688 = scalar_lea.vmem %s1, 32
  %v689 = vld [vmem:[%s688] sm:$0xff]
  %v690 = vld [vmem:[%s688 + $0x8] sm:$0xff]
  %v691 = vld [vmem:[%s688 + $0x10] sm:$0xff]
  %v692 = vld [vmem:[%s688 + $0x18] sm:$0xff]
  %s693 = scalar_lea.vmem [#allocation2], 8
  %v694 = vld [vmem:[%s693] sm:$0xff]
  %s695 = scalar_lea.vmem [#allocation3], 8
  %v696 = vld [vmem:[%s695] sm:$0xff]
  %v697 = vld [vmem:[#allocation5] sm:$0xff]
  %v699 = vsel %vm46, %v694, 0
  %701 = vmatpush.msra.mxu0 0.0
  %702 = vmatpush.msra.mxu0 0.0
  %703 = vmatpush.msra.mxu0 0.0
  %704 = vmatpush.msra.mxu0 0.0
  %705 = vmatpush.msra.mxu0 0.0
  %706 = vmatpush.msra.mxu0 0.0
  %707 = vmatpush.msra.mxu0 0.0
  %708 = vmatpush.msra.mxu0 0.0
  %709 = vmatpush.msra.mxu0 0.0
  %710 = vmatpush.msra.mxu0 0.0
  %711 = vmatpush.msra.mxu0 0.0
  %712 = vmatpush.msra.mxu0 0.0
  %713 = vmatpush.msra.mxu0 %v692
  %714 = vmatpush.msra.mxu0 %v691
  %715 = vmatpush.msra.mxu0 %v690
  %716 = vmatpush.msra.mxu0 %v689
  %717 = vmatmul.f32.gmra.mxu0 %v699
  %v718 = vpop.f32.mrf.mxu0
  %v719 = vadd.f32 0.0, %v718
  %720 = vdwg.mxu0
  %v721 = vadd.f32 %v697, %v719
  %v722 = vxor.u32 %v721, 2147483648
  %v723 = vmul.f32 %v722, 1.442695
  %v724 = vpow.pop %v723
  %v725 = vadd.f32 %v724, 1.0
  %v726 = vrcp.pop %v725
  %v727 = vmul.f32 %v725, %v726
  %v728 = vsub.f32 1.0, %v727
  %v729 = vmul.f32 %v726, %v728
  %v730 = vadd.f32 %v726, %v729
  %vm731 = vweird.f32 %v725
  %vm732 = vweird.f32 %v726
  %vm733 = vmor %vm731, %vm732
  %v734 = vsel %vm733, %v726, %v730
  %v735 = vand.u32 2147483647, %v725
  %vm736 = vcmp.eq.f32.partialorder %v735, 8.507059e+37
  %v737 = vand.u32 %v725, 2147483648
  %v738 = vor.u32 1.1754944e-38, %v737
  %v739 = vsel %vm736, %v738, %v734
  %v740 = vmul.f32 1.0, %v739
  %v741 = vtanh.pop %v721
  %743 = vrot.lane.b32.xlu0 %v696, 32
  %v744 = vpop.permute.xlu0 %743
  %v746 = vmul.f32 %v740, %v744
  %748 = vrot.lane.b32.xlu0 %v741, 64
  %v749 = vpop.permute.xlu0 %748
  %v751 = vmul.f32 %v740, %v749
  %753 = vrot.lane.b32.xlu0 %v751, 32
  %v754 = vpop.permute.xlu0 %753
  %v756 = vadd.f32 %v746, %v754
  %v757 = vtanh.pop %v756
  %759 = vrot.lane.b32.xlu0 %v757, 64
  %v760 = vpop.permute.xlu0 %759
  %v762 = vmul.f32 %v740, %v760
  %764 = vrot.lane.b32.xlu0 %v762, 32
  %v765 = vpop.permute.xlu0 %764
  %767 = vst.msk [vmem:[%s6] sm:$0xff] %vm46, %v765
  %s768 = scalar_lea.vmem [#allocation5], 8
  %v769 = vld [vmem:[%s768] sm:$0xff]
  %v770 = vsel %vm46, %v765, 0
  %772 = vmatpush.msra.mxu0 0.0
  %773 = vmatpush.msra.mxu0 0.0
  %774 = vmatpush.msra.mxu0 0.0
  %775 = vmatpush.msra.mxu0 0.0
  %776 = vmatpush.msra.mxu0 0.0
  %777 = vmatpush.msra.mxu0 0.0
  %778 = vmatpush.msra.mxu0 0.0
  %779 = vmatpush.msra.mxu0 0.0
  %780 = vmatpush.msra.mxu0 0.0
  %781 = vmatpush.msra.mxu0 0.0
  %782 = vmatpush.msra.mxu0 0.0
  %783 = vmatpush.msra.mxu0 0.0
  %784 = vmatpush.msra.mxu0 %v692
  %785 = vmatpush.msra.mxu0 %v691
  %786 = vmatpush.msra.mxu0 %v690
  %787 = vmatpush.msra.mxu0 %v689
  %788 = vmatmul.f32.gmra.mxu0 %v770
  %v789 = vpop.f32.mrf.mxu0
  %v790 = vadd.f32 0.0, %v789
  %791 = vdwg.mxu0
  %v792 = vadd.f32 %v769, %v790
  %v793 = vxor.u32 %v792, 2147483648
  %v794 = vmul.f32 %v793, 1.442695
  %v795 = vpow.pop %v794
  %v796 = vadd.f32 %v795, 1.0
  %v797 = vrcp.pop %v796
  %v798 = vmul.f32 %v796, %v797
  %v799 = vsub.f32 1.0, %v798
  %v800 = vmul.f32 %v797, %v799
  %v801 = vadd.f32 %v797, %v800
  %vm802 = vweird.f32 %v796
  %vm803 = vweird.f32 %v797
  %vm804 = vmor %vm802, %vm803
  %v805 = vsel %vm804, %v797, %v801
  %v806 = vand.u32 2147483647, %v796
  %vm807 = vcmp.eq.f32.partialorder %v806, 8.507059e+37
  %v808 = vand.u32 %v796, 2147483648
  %v809 = vor.u32 1.1754944e-38, %v808
  %v810 = vsel %vm807, %v809, %v805
  %v811 = vmul.f32 1.0, %v810
  %v812 = vtanh.pop %v792
  %v813 = vmul.f32 %v811, %v756
  %815 = vrot.lane.b32.xlu0 %v812, 64
  %v816 = vpop.permute.xlu0 %815
  %v818 = vmul.f32 %v811, %v816
  %820 = vrot.lane.b32.xlu0 %v818, 32
  %v821 = vpop.permute.xlu0 %820
  %v823 = vadd.f32 %v813, %v821
  %v824 = vtanh.pop %v823
  %826 = vrot.lane.b32.xlu0 %v824, 64
  %v827 = vpop.permute.xlu0 %826
  %v829 = vmul.f32 %v811, %v827
  %831 = vrot.lane.b32.xlu0 %v829, 32
  %v832 = vpop.permute.xlu0 %831
  %s834 = scalar_lea.vmem %s6, 8
  %835 = vst.msk [vmem:[%s834] sm:$0xff] %vm46, %v832
  %s836 = scalar_lea.vmem [#allocation5], 16
  %v837 = vld [vmem:[%s836] sm:$0xff]
  %v838 = vsel %vm46, %v832, 0
  %840 = vmatpush.msra.mxu0 0.0
  %841 = vmatpush.msra.mxu0 0.0
  %842 = vmatpush.msra.mxu0 0.0
  %843 = vmatpush.msra.mxu0 0.0
  %844 = vmatpush.msra.mxu0 0.0
  %845 = vmatpush.msra.mxu0 0.0
  %846 = vmatpush.msra.mxu0 0.0
  %847 = vmatpush.msra.mxu0 0.0
  %848 = vmatpush.msra.mxu0 0.0
  %849 = vmatpush.msra.mxu0 0.0
  %850 = vmatpush.msra.mxu0 0.0
  %851 = vmatpush.msra.mxu0 0.0
  %852 = vmatpush.msra.mxu0 %v692
  %853 = vmatpush.msra.mxu0 %v691
  %854 = vmatpush.msra.mxu0 %v690
  %855 = vmatpush.msra.mxu0 %v689
  %856 = vmatmul.f32.gmra.mxu0 %v838
  %v857 = vpop.f32.mrf.mxu0
  %v858 = vadd.f32 0.0, %v857
  %859 = vdwg.mxu0
  %v860 = vadd.f32 %v837, %v858
  %v861 = vxor.u32 %v860, 2147483648
  %v862 = vmul.f32 %v861, 1.442695
  %v863 = vpow.pop %v862
  %v864 = vadd.f32 %v863, 1.0
  %v865 = vrcp.pop %v864
  %v866 = vmul.f32 %v864, %v865
  %v867 = vsub.f32 1.0, %v866
  %v868 = vmul.f32 %v865, %v867
  %v869 = vadd.f32 %v865, %v868
  %vm870 = vweird.f32 %v864
  %vm871 = vweird.f32 %v865
  %vm872 = vmor %vm870, %vm871
  %v873 = vsel %vm872, %v865, %v869
  %v874 = vand.u32 2147483647, %v864
  %vm875 = vcmp.eq.f32.partialorder %v874, 8.507059e+37
  %v876 = vand.u32 %v864, 2147483648
  %v877 = vor.u32 1.1754944e-38, %v876
  %v878 = vsel %vm875, %v877, %v873
  %v879 = vmul.f32 1.0, %v878
  %v880 = vtanh.pop %v860
  %v881 = vmul.f32 %v879, %v823
  %883 = vrot.lane.b32.xlu0 %v880, 64
  %v884 = vpop.permute.xlu0 %883
  %v886 = vmul.f32 %v879, %v884
  %888 = vrot.lane.b32.xlu0 %v886, 32
  %v889 = vpop.permute.xlu0 %888
  %v891 = vadd.f32 %v881, %v889
  %v892 = vtanh.pop %v891
  %894 = vrot.lane.b32.xlu0 %v892, 64
  %v895 = vpop.permute.xlu0 %894
  %v897 = vmul.f32 %v879, %v895
  %899 = vrot.lane.b32.xlu0 %v897, 32
  %v900 = vpop.permute.xlu0 %899
  %s902 = scalar_lea.vmem %s6, 16
  %903 = vst.msk [vmem:[%s902] sm:$0xff] %vm46, %v900
  %s904 = scalar_lea.vmem [#allocation5], 24
  %v905 = vld [vmem:[%s904] sm:$0xff]
  %v906 = vsel %vm46, %v900, 0
  %908 = vmatpush.msra.mxu0 0.0
  %909 = vmatpush.msra.mxu0 0.0
  %910 = vmatpush.msra.mxu0 0.0
  %911 = vmatpush.msra.mxu0 0.0
  %912 = vmatpush.msra.mxu0 0.0
  %913 = vmatpush.msra.mxu0 0.0
  %914 = vmatpush.msra.mxu0 0.0
  %915 = vmatpush.msra.mxu0 0.0
  %916 = vmatpush.msra.mxu0 0.0
  %917 = vmatpush.msra.mxu0 0.0
  %918 = vmatpush.msra.mxu0 0.0
  %919 = vmatpush.msra.mxu0 0.0
  %920 = vmatpush.msra.mxu0 %v692
  %921 = vmatpush.msra.mxu0 %v691
  %922 = vmatpush.msra.mxu0 %v690
  %923 = vmatpush.msra.mxu0 %v689
  %924 = vmatmul.f32.gmra.mxu0 %v906
  %v925 = vpop.f32.mrf.mxu0
  %v926 = vadd.f32 0.0, %v925
  %927 = vdwg.mxu0
  %v928 = vadd.f32 %v905, %v926
  %v929 = vxor.u32 %v928, 2147483648
  %v930 = vmul.f32 %v929, 1.442695
  %v931 = vpow.pop %v930
  %v932 = vadd.f32 %v931, 1.0
  %v933 = vrcp.pop %v932
  %v934 = vmul.f32 %v932, %v933
  %v935 = vsub.f32 1.0, %v934
  %v936 = vmul.f32 %v933, %v935
  %v937 = vadd.f32 %v933, %v936
  %vm938 = vweird.f32 %v932
  %vm939 = vweird.f32 %v933
  %vm940 = vmor %vm938, %vm939
  %v941 = vsel %vm940, %v933, %v937
  %v942 = vand.u32 2147483647, %v932
  %vm943 = vcmp.eq.f32.partialorder %v942, 8.507059e+37
  %v944 = vand.u32 %v932, 2147483648
  %v945 = vor.u32 1.1754944e-38, %v944
  %v946 = vsel %vm943, %v945, %v941
  %v947 = vmul.f32 1.0, %v946
  %v948 = vtanh.pop %v928
  %v949 = vmul.f32 %v947, %v891
  %951 = vrot.lane.b32.xlu0 %v948, 64
  %v952 = vpop.permute.xlu0 %951
  %v954 = vmul.f32 %v947, %v952
  %956 = vrot.lane.b32.xlu0 %v954, 32
  %v957 = vpop.permute.xlu0 %956
  %v959 = vadd.f32 %v949, %v957
  %v960 = vtanh.pop %v959
  %962 = vrot.lane.b32.xlu0 %v960, 64
  %v963 = vpop.permute.xlu0 %962
  %v965 = vmul.f32 %v947, %v963
  %967 = vrot.lane.b32.xlu0 %v965, 32
  %v968 = vpop.permute.xlu0 %967
  %s970 = scalar_lea.vmem %s6, 24
  %971 = vst.msk [vmem:[%s970] sm:$0xff] %vm46, %v968
  %s972 = scalar_lea.vmem [#allocation5], 32
  %v973 = vld [vmem:[%s972] sm:$0xff]
  %v974 = vsel %vm46, %v968, 0
  %976 = vmatpush.msra.mxu0 0.0
  %977 = vmatpush.msra.mxu0 0.0
  %978 = vmatpush.msra.mxu0 0.0
  %979 = vmatpush.msra.mxu0 0.0
  %980 = vmatpush.msra.mxu0 0.0
  %981 = vmatpush.msra.mxu0 0.0
  %982 = vmatpush.msra.mxu0 0.0
  %983 = vmatpush.msra.mxu0 0.0
  %984 = vmatpush.msra.mxu0 0.0
  %985 = vmatpush.msra.mxu0 0.0
  %986 = vmatpush.msra.mxu0 0.0
  %987 = vmatpush.msra.mxu0 0.0
  %988 = vmatpush.msra.mxu0 %v692
  %989 = vmatpush.msra.mxu0 %v691
  %990 = vmatpush.msra.mxu0 %v690
  %991 = vmatpush.msra.mxu0 %v689
  %992 = vmatmul.f32.gmra.mxu0 %v974
  %v993 = vpop.f32.mrf.mxu0
  %v994 = vadd.f32 0.0, %v993
  %995 = vdwg.mxu0
  %v996 = vadd.f32 %v973, %v994
  %v997 = vxor.u32 %v996, 2147483648
  %v998 = vmul.f32 %v997, 1.442695
  %v999 = vpow.pop %v998
  %v1000 = vadd.f32 %v999, 1.0
  %v1001 = vrcp.pop %v1000
  %v1002 = vmul.f32 %v1000, %v1001
  %v1003 = vsub.f32 1.0, %v1002
  %v1004 = vmul.f32 %v1001, %v1003
  %v1005 = vadd.f32 %v1001, %v1004
  %vm1006 = vweird.f32 %v1000
  %vm1007 = vweird.f32 %v1001
  %vm1008 = vmor %vm1006, %vm1007
  %v1009 = vsel %vm1008, %v1001, %v1005
  %v1010 = vand.u32 2147483647, %v1000
  %vm1011 = vcmp.eq.f32.partialorder %v1010, 8.507059e+37
  %v1012 = vand.u32 %v1000, 2147483648
  %v1013 = vor.u32 1.1754944e-38, %v1012
  %v1014 = vsel %vm1011, %v1013, %v1009
  %v1015 = vmul.f32 1.0, %v1014
  %v1016 = vtanh.pop %v996
  %v1017 = vmul.f32 %v1015, %v959
  %1019 = vrot.lane.b32.xlu0 %v1016, 64
  %v1020 = vpop.permute.xlu0 %1019
  %v1022 = vmul.f32 %v1015, %v1020
  %1024 = vrot.lane.b32.xlu0 %v1022, 32
  %v1025 = vpop.permute.xlu0 %1024
  %v1027 = vadd.f32 %v1017, %v1025
  %v1028 = vtanh.pop %v1027
  %1030 = vrot.lane.b32.xlu0 %v1028, 64
  %v1031 = vpop.permute.xlu0 %1030
  %v1033 = vmul.f32 %v1015, %v1031
  %1035 = vrot.lane.b32.xlu0 %v1033, 32
  %v1036 = vpop.permute.xlu0 %1035
  %s1038 = scalar_lea.vmem %s6, 32
  %1039 = vst.msk [vmem:[%s1038] sm:$0xff] %vm46, %v1036
  %s1040 = scalar_lea.vmem [#allocation5], 40
  %v1041 = vld [vmem:[%s1040] sm:$0xff]
  %v1042 = vsel %vm46, %v1036, 0
  %1044 = vmatpush.msra.mxu0 0.0
  %1045 = vmatpush.msra.mxu0 0.0
  %1046 = vmatpush.msra.mxu0 0.0
  %1047 = vmatpush.msra.mxu0 0.0
  %1048 = vmatpush.msra.mxu0 0.0
  %1049 = vmatpush.msra.mxu0 0.0
  %1050 = vmatpush.msra.mxu0 0.0
  %1051 = vmatpush.msra.mxu0 0.0
  %1052 = vmatpush.msra.mxu0 0.0
  %1053 = vmatpush.msra.mxu0 0.0
  %1054 = vmatpush.msra.mxu0 0.0
  %1055 = vmatpush.msra.mxu0 0.0
  %1056 = vmatpush.msra.mxu0 %v692
  %1057 = vmatpush.msra.mxu0 %v691
  %1058 = vmatpush.msra.mxu0 %v690
  %1059 = vmatpush.msra.mxu0 %v689
  %1060 = vmatmul.f32.gmra.mxu0 %v1042
  %v1061 = vpop.f32.mrf.mxu0
  %v1062 = vadd.f32 0.0, %v1061
  %1063 = vdwg.mxu0
  %v1064 = vadd.f32 %v1041, %v1062
  %v1065 = vxor.u32 %v1064, 2147483648
  %v1066 = vmul.f32 %v1065, 1.442695
  %v1067 = vpow.pop %v1066
  %v1068 = vadd.f32 %v1067, 1.0
  %v1069 = vrcp.pop %v1068
  %v1070 = vmul.f32 %v1068, %v1069
  %v1071 = vsub.f32 1.0, %v1070
  %v1072 = vmul.f32 %v1069, %v1071
  %v1073 = vadd.f32 %v1069, %v1072
  %vm1074 = vweird.f32 %v1068
  %vm1075 = vweird.f32 %v1069
  %vm1076 = vmor %vm1074, %vm1075
  %v1077 = vsel %vm1076, %v1069, %v1073
  %v1078 = vand.u32 2147483647, %v1068
  %vm1079 = vcmp.eq.f32.partialorder %v1078, 8.507059e+37
  %v1080 = vand.u32 %v1068, 2147483648
  %v1081 = vor.u32 1.1754944e-38, %v1080
  %v1082 = vsel %vm1079, %v1081, %v1077
  %v1083 = vmul.f32 1.0, %v1082
  %v1084 = vtanh.pop %v1064
  %v1085 = vmul.f32 %v1083, %v1027
  %1087 = vrot.lane.b32.xlu0 %v1084, 64
  %v1088 = vpop.permute.xlu0 %1087
  %v1090 = vmul.f32 %v1083, %v1088
  %1092 = vrot.lane.b32.xlu0 %v1090, 32
  %v1093 = vpop.permute.xlu0 %1092
  %v1095 = vadd.f32 %v1085, %v1093
  %v1096 = vtanh.pop %v1095
  %1098 = vrot.lane.b32.xlu0 %v1096, 64
  %v1099 = vpop.permute.xlu0 %1098
  %v1101 = vmul.f32 %v1083, %v1099
  %1103 = vrot.lane.b32.xlu0 %v1101, 32
  %v1104 = vpop.permute.xlu0 %1103
  %s1106 = scalar_lea.vmem %s6, 40
  %1107 = vst.msk [vmem:[%s1106] sm:$0xff] %vm46, %v1104
  %s1108 = scalar_lea.vmem [#allocation5], 48
  %v1109 = vld [vmem:[%s1108] sm:$0xff]
  %v1110 = vsel %vm46, %v1104, 0
  %1112 = vmatpush.msra.mxu0 0.0
  %1113 = vmatpush.msra.mxu0 0.0
  %1114 = vmatpush.msra.mxu0 0.0
  %1115 = vmatpush.msra.mxu0 0.0
  %1116 = vmatpush.msra.mxu0 0.0
  %1117 = vmatpush.msra.mxu0 0.0
  %1118 = vmatpush.msra.mxu0 0.0
  %1119 = vmatpush.msra.mxu0 0.0
  %1120 = vmatpush.msra.mxu0 0.0
  %1121 = vmatpush.msra.mxu0 0.0
  %1122 = vmatpush.msra.mxu0 0.0
  %1123 = vmatpush.msra.mxu0 0.0
  %1124 = vmatpush.msra.mxu0 %v692
  %1125 = vmatpush.msra.mxu0 %v691
  %1126 = vmatpush.msra.mxu0 %v690
  %1127 = vmatpush.msra.mxu0 %v689
  %1128 = vmatmul.f32.gmra.mxu0 %v1110
  %v1129 = vpop.f32.mrf.mxu0
  %v1130 = vadd.f32 0.0, %v1129
  %1131 = vdwg.mxu0
  %v1132 = vadd.f32 %v1109, %v1130
  %v1133 = vxor.u32 %v1132, 2147483648
  %v1134 = vmul.f32 %v1133, 1.442695
  %v1135 = vpow.pop %v1134
  %v1136 = vadd.f32 %v1135, 1.0
  %v1137 = vrcp.pop %v1136
  %v1138 = vmul.f32 %v1136, %v1137
  %v1139 = vsub.f32 1.0, %v1138
  %v1140 = vmul.f32 %v1137, %v1139
  %v1141 = vadd.f32 %v1137, %v1140
  %vm1142 = vweird.f32 %v1136
  %vm1143 = vweird.f32 %v1137
  %vm1144 = vmor %vm1142, %vm1143
  %v1145 = vsel %vm1144, %v1137, %v1141
  %v1146 = vand.u32 2147483647, %v1136
  %vm1147 = vcmp.eq.f32.partialorder %v1146, 8.507059e+37
  %v1148 = vand.u32 %v1136, 2147483648
  %v1149 = vor.u32 1.1754944e-38, %v1148
  %v1150 = vsel %vm1147, %v1149, %v1145
  %v1151 = vmul.f32 1.0, %v1150
  %v1152 = vtanh.pop %v1132
  %v1153 = vmul.f32 %v1151, %v1095
  %1155 = vrot.lane.b32.xlu0 %v1152, 64
  %v1156 = vpop.permute.xlu0 %1155
  %v1158 = vmul.f32 %v1151, %v1156
  %1160 = vrot.lane.b32.xlu0 %v1158, 32
  %v1161 = vpop.permute.xlu0 %1160
  %v1163 = vadd.f32 %v1153, %v1161
  %v1164 = vtanh.pop %v1163
  %1166 = vrot.lane.b32.xlu0 %v1164, 64
  %v1167 = vpop.permute.xlu0 %1166
  %v1169 = vmul.f32 %v1151, %v1167
  %1171 = vrot.lane.b32.xlu0 %v1169, 32
  %v1172 = vpop.permute.xlu0 %1171
  %s1174 = scalar_lea.vmem %s6, 48
  %1175 = vst.msk [vmem:[%s1174] sm:$0xff] %vm46, %v1172
  %s1176 = scalar_lea.vmem [#allocation5], 56
  %v1177 = vld [vmem:[%s1176] sm:$0xff]
  %v1178 = vsel %vm46, %v1172, 0
  %1180 = vmatpush.msra.mxu0 0.0
  %1181 = vmatpush.msra.mxu0 0.0
  %1182 = vmatpush.msra.mxu0 0.0
  %1183 = vmatpush.msra.mxu0 0.0
  %1184 = vmatpush.msra.mxu0 0.0
  %1185 = vmatpush.msra.mxu0 0.0
  %1186 = vmatpush.msra.mxu0 0.0
  %1187 = vmatpush.msra.mxu0 0.0
  %1188 = vmatpush.msra.mxu0 0.0
  %1189 = vmatpush.msra.mxu0 0.0
  %1190 = vmatpush.msra.mxu0 0.0
  %1191 = vmatpush.msra.mxu0 0.0
  %1192 = vmatpush.msra.mxu0 %v692
  %1193 = vmatpush.msra.mxu0 %v691
  %1194 = vmatpush.msra.mxu0 %v690
  %1195 = vmatpush.msra.mxu0 %v689
  %1196 = vmatmul.f32.gmra.mxu0 %v1178
  %v1197 = vpop.f32.mrf.mxu0
  %v1198 = vadd.f32 0.0, %v1197
  %1199 = vdwg.mxu0
  %v1200 = vadd.f32 %v1177, %v1198
  %v1201 = vxor.u32 %v1200, 2147483648
  %v1202 = vmul.f32 %v1201, 1.442695
  %v1203 = vpow.pop %v1202
  %v1204 = vadd.f32 %v1203, 1.0
  %v1205 = vrcp.pop %v1204
  %v1206 = vmul.f32 %v1204, %v1205
  %v1207 = vsub.f32 1.0, %v1206
  %v1208 = vmul.f32 %v1205, %v1207
  %v1209 = vadd.f32 %v1205, %v1208
  %vm1210 = vweird.f32 %v1204
  %vm1211 = vweird.f32 %v1205
  %vm1212 = vmor %vm1210, %vm1211
  %v1213 = vsel %vm1212, %v1205, %v1209
  %v1214 = vand.u32 2147483647, %v1204
  %vm1215 = vcmp.eq.f32.partialorder %v1214, 8.507059e+37
  %v1216 = vand.u32 %v1204, 2147483648
  %v1217 = vor.u32 1.1754944e-38, %v1216
  %v1218 = vsel %vm1215, %v1217, %v1213
  %v1219 = vmul.f32 1.0, %v1218
  %v1220 = vtanh.pop %v1200
  %v1221 = vmul.f32 %v1219, %v1163
  %1223 = vrot.lane.b32.xlu0 %v1220, 64
  %v1224 = vpop.permute.xlu0 %1223
  %v1226 = vmul.f32 %v1219, %v1224
  %1228 = vrot.lane.b32.xlu0 %v1226, 32
  %v1229 = vpop.permute.xlu0 %1228
  %v1231 = vadd.f32 %v1221, %v1229
  %v1232 = vtanh.pop %v1231
  %1234 = vrot.lane.b32.xlu0 %v1232, 64
  %v1235 = vpop.permute.xlu0 %1234
  %v1237 = vmul.f32 %v1219, %v1235
  %1239 = vrot.lane.b32.xlu0 %v1237, 32
  %v1240 = vpop.permute.xlu0 %1239
  %s1242 = scalar_lea.vmem %s6, 56
  %1243 = vst.msk [vmem:[%s1242] sm:$0xff] %vm46, %v1240
  %1244 = vst.msk [vmem:[%s693] sm:$0xff] %vm46, %v1240
  %1246 = vrot.lane.b32.xlu0 %v1231, 96
  %v1247 = vpop.permute.xlu0 %1246
  %1249 = vst.msk [vmem:[%s695] sm:$0xff] %vm46, %v1247
  // Predicated region
  $region30: #{dec_lstm_cnn_forward.1} parent=0 // pred_check
    %p1250 = pneg %p26
  $region31: #{dec_lstm_cnn_forward.1} parent=0 // pred_check_branch
    %1252 = sbr.rel (%p1250) target = $region33
  $region32: #{dec_lstm_cnn_forward.1} parent=0 // pred_region
    %v1253 = vld [vmem:[#allocation2] sm:$0xff]
    %v1254 = vld [vmem:[#allocation2 + $0x8] sm:$0xff]
    %1255 = vst.msk [vmem:[%s7] sm:$0xff] %vm46, %v1253
    %1256 = vst.msk [vmem:[%s7 + $0x8] sm:$0xff] %vm46, %v1254
    %v1257 = vld [vmem:[#allocation3] sm:$0xff]
    %v1258 = vld [vmem:[#allocation3 + $0x8] sm:$0xff]
    %1259 = vst.msk [vmem:[%s8] sm:$0xff] %vm46, %v1257
    %1260 = vst.msk [vmem:[%s8 + $0x8] sm:$0xff] %vm46, %v1258
  $region33: #{dec_lstm_cnn_forward.1} parent=0 // pred_fallthru
    _
  // Predicated region
  $region34: #{dec_lstm_cnn_forward.1} parent=0 // pred_check
    _
  $region35: #{dec_lstm_cnn_forward.1} parent=0 // pred_check_branch
    %1262 = sbr.rel (0) target = $region37
  $region36: #{dec_lstm_cnn_forward.1} parent=0 // pred_region
    _
  $region37: #{dec_lstm_cnn_forward.1} parent=0 // pred_fallthru
    _
  // Predicated region
  $region38: #{dec_lstm_cnn_forward.1} parent=0 // pred_check
    _
  $region39: #{dec_lstm_cnn_forward.1} parent=0 // pred_check_branch
    %1264 = sbr.rel (0) target = $region41
  $region40: #{dec_lstm_cnn_forward.1} parent=0 // pred_region
    _
  $region41: #{dec_lstm_cnn_forward.1} parent=0 // pred_fallthru
    _
  // Predicated region
  $region42: #{dec_lstm_cnn_forward.1} parent=0 // pred_check
    _
  $region43: #{dec_lstm_cnn_forward.1} parent=0 // pred_check_branch
    %1266 = sbr.rel (0) target = $region45
  $region44: #{dec_lstm_cnn_forward.1} parent=0 // pred_region
    _
  $region45: #{dec_lstm_cnn_forward.1} parent=0 // pred_fallthru
    _
  // Predicated region
  $region46: #{dec_lstm_cnn_forward.1} parent=0 // pred_check
    _
  $region47: #{dec_lstm_cnn_forward.1} parent=0 // pred_check_branch
    %1268 = sbr.rel (0) target = $region49
  $region48: #{dec_lstm_cnn_forward.1} parent=0 // pred_region
    _
  $region49: #{dec_lstm_cnn_forward.1} parent=0 // pred_fallthru
    _
  // Predicated region
  $region50: #{dec_lstm_cnn_forward.1} parent=0 // pred_check
    _
  $region51: #{dec_lstm_cnn_forward.1} parent=0 // pred_check_branch
    %1270 = sbr.rel (0) target = $region53
  $region52: #{dec_lstm_cnn_forward.1} parent=0 // pred_region
    _
  $region53: #{dec_lstm_cnn_forward.1} parent=0 // pred_fallthru
    _
  // Predicated region
  $region54: #{dec_lstm_cnn_forward.1} parent=0 // pred_check
    _
  $region55: #{dec_lstm_cnn_forward.1} parent=0 // pred_check_branch
    %1272 = sbr.rel (0) target = $region57
  $region56: #{dec_lstm_cnn_forward.1} parent=0 // pred_region
    _
  $region57: #{dec_lstm_cnn_forward.1} parent=0 // pred_fallthru
    _

</llo_original>
